<compile_context>
chip_gen: v7x
topology: tpu7x:2x2x1
jax: 0.10.0
libtpu: 0.0.40
codegen_flags: <defaults>
</compile_context>

<pallas_src>
import functools
import math

import jax
import jax.numpy as jnp
from jax.experimental import pallas as pl
from jax.experimental.pallas import tpu as pltpu


def _pointer_attention_kernel(q_ref, k_ref, v_ref, lk_ref, mask_ref, w_ref,
                              out_ref, *, num_heads):
    """One batch element per grid step.

    q_ref:    [1, G, E]   glimpse query
    k_ref:    [1, N, E]   keys
    v_ref:    [1, N, E]   values
    lk_ref:   [1, N, E]   logit keys
    mask_ref: [1, 1, N]   int32, nonzero = attend (torch bool-mask semantics)
    w_ref:    [E, E]      project_out weight, pre-transposed (x @ w == Linear(x))
    out_ref:  [1, G, N]   logits
    """
    G = q_ref.shape[1]
    E = q_ref.shape[2]
    S = E // num_heads

    q = q_ref[0].astype(jnp.float32)       # [G, E]
    k = k_ref[0].astype(jnp.float32)       # [N, E]
    v = v_ref[0].astype(jnp.float32)       # [N, E]
    lk = lk_ref[0].astype(jnp.float32)     # [N, E]
    keep = mask_ref[0] != 0                # [1, N] bool, broadcasts over G
    w_t = w_ref[...].astype(jnp.float32)   # [E, E]

    inv_sqrt_s = jnp.float32(1.0 / math.sqrt(S))
    inv_sqrt_e = jnp.float32(1.0 / math.sqrt(E))
    neg_big = jnp.float32(-1e30)           # exp() underflows to exactly 0.0

    contract_last = (((1,), (1,)), ((), ()))  # contract last dim of both operands

    glimpse = jnp.zeros((G, E), jnp.float32)
    for h in range(num_heads):             # small static H -> unrolled at trace time
        sl = slice(h * S, (h + 1) * S)
        q_h = q[:, sl]                     # [G, S]
        k_h = k[:, sl]                     # [N, S]
        v_h = v[:, sl]                     # [N, S]

        # scores = q_h @ k_h^T / sqrt(S)   (MXU)
        scores = jax.lax.dot_general(q_h, k_h, contract_last,
                                     preferred_element_type=jnp.float32)
        scores = scores * inv_sqrt_s
        scores = jnp.where(keep, scores, neg_big)

        # softmax over the node axis
        m = jnp.max(scores, axis=-1, keepdims=True)
        p = jnp.exp(scores - m)
        p = p / jnp.sum(p, axis=-1, keepdims=True)

        head_out = jnp.dot(p, v_h, preferred_element_type=jnp.float32)   # [G, S]

        # concat_h(head_out) @ W^T  ==  sum_h head_out_h @ W^T[h*S:(h+1)*S, :]
        glimpse = glimpse + jnp.dot(head_out, w_t[sl, :],
                                    preferred_element_type=jnp.float32)  # [G, E]

    # logits = glimpse @ logit_key^T / sqrt(E)
    logits = jax.lax.dot_general(glimpse, lk, contract_last,
                                 preferred_element_type=jnp.float32)
    logits = logits * inv_sqrt_e
    # TODO(synk): reference's `check_nan` runtime assert has no in-kernel
    # equivalent; finiteness is verified host-side after the call.
    out_ref[0] = logits.astype(out_ref.dtype)


def pointer_attention(query, key, value, logit_key, attn_mask, w_out, *,
                      num_heads):
    """Pallas equivalent of PointerAttention.forward (mask_inner=True, out_bias=False).

    query:     [B, G, E]                    (G = #glimpse queries, typically 1)
    key/value: [B, N, E]
    logit_key: [B, N, E] or [B, N, 1, E]    (mirrors the torch .squeeze(-2))
    attn_mask: [B, N] bool, True = attend
    w_out:     [E, E] nn.Linear(E, E, bias=False) weight, layout (out, in)
    returns:   [B, N] if G == 1 else [B, G, N]
    """
    if logit_key.ndim == 4:
        logit_key = jnp.squeeze(logit_key, axis=-2)
    B, G, E = query.shape
    N = key.shape[1]
    assert E % num_heads == 0

    mask_i32 = attn_mask.astype(jnp.int32).reshape(B, 1, N)
    w_t = jnp.transpose(w_out)   # so that x @ w_t == x @ W.T == nn.Linear(x)

    kernel = functools.partial(_pointer_attention_kernel, num_heads=num_heads)
    logits = pl.pallas_call(
        kernel,
        grid=(B,),
        in_specs=[
            pl.BlockSpec((1, G, E), lambda b: (b, 0, 0)),   # query
            pl.BlockSpec((1, N, E), lambda b: (b, 0, 0)),   # key
            pl.BlockSpec((1, N, E), lambda b: (b, 0, 0)),   # value
            pl.BlockSpec((1, N, E), lambda b: (b, 0, 0)),   # logit_key
            pl.BlockSpec((1, 1, N), lambda b: (b, 0, 0)),   # mask
            pl.BlockSpec((E, E), lambda b: (0, 0)),         # W_out^T (shared)
        ],
        out_specs=pl.BlockSpec((1, G, N), lambda b: (b, 0, 0)),
        out_shape=jax.ShapeDtypeStruct((B, G, N), query.dtype),
        compiler_params=pltpu.CompilerParams(
            dimension_semantics=("parallel",),
        ),
    )(query, key, value, logit_key, mask_i32, w_t)

    return jnp.squeeze(logits, axis=-2) if G == 1 else logits


def _reference_pointer_attention(query, key, value, logit_key, attn_mask,
                                 w_out, num_heads):
    """Pure-JAX transcription of the PyTorch forward, for verification."""
    B, G, E = query.shape
    S = E // num_heads

    def make_heads(x):  # '... g (h s) -> ... h g s'
        return x.reshape(B, -1, num_heads, S).transpose(0, 2, 1, 3)

    q, k, v = make_heads(query), make_heads(key), make_heads(value)
    scores = jnp.einsum('bhgs,bhns->bhgn', q, k) / math.sqrt(S)
    scores = jnp.where(attn_mask[:, None, None, :], scores, -jnp.inf)
    probs = jax.nn.softmax(scores, axis=-1)
    heads = jnp.einsum('bhgn,bhns->bhgs', probs, v)
    heads = heads.transpose(0, 2, 1, 3).reshape(B, G, E)   # '... h n g -> ... n (h g)'
    glimpse = heads @ w_out.T
    lk = jnp.squeeze(logit_key, axis=-2) if logit_key.ndim == 4 else logit_key
    logits = jnp.einsum('bge,bne->bgn', glimpse, lk) / math.sqrt(E)
    return jnp.squeeze(logits, axis=-2) if G == 1 else logits


if __name__ == "__main__":
    B, G, N, E, H = 2, 1, 16, 32, 4

    key0 = jax.random.PRNGKey(0)
    kq, kk, kv, kl, kw, km = jax.random.split(key0, 6)

    query = jax.random.normal(kq, (B, G, E), dtype=jnp.float32)
    key_ = jax.random.normal(kk, (B, N, E), dtype=jnp.float32)
    value = jax.random.normal(kv, (B, N, E), dtype=jnp.float32)
    logit_key = jax.random.normal(kl, (B, N, 1, E), dtype=jnp.float32)
    w_out = jax.random.normal(kw, (E, E), dtype=jnp.float32) / math.sqrt(E)
    attn_mask = jax.random.bernoulli(km, 0.7, (B, N))
    attn_mask = attn_mask.at[:, 0].set(True)   # >= 1 attendable node per row

    out = pointer_attention(query, key_, value, logit_key, attn_mask, w_out,
                            num_heads=H)
    out = jax.block_until_ready(out)

    ref = _reference_pointer_attention(query, key_, value, logit_key, attn_mask,
                                       w_out, H)

    assert out.shape == ref.shape == (B, N)
    assert bool(jnp.all(jnp.isfinite(out))), "Logits contain NaNs"
    assert bool(jnp.allclose(out, ref, rtol=1e-4, atol=1e-4)), (out, ref)
    print("KERNEL_OK")
</pallas_src>

<mosaic_0001>
module attributes {stable_mosaic.version = 11 : i64} {
  func.func @_pointer_attention_kernel(%arg0: i32, %arg1: memref<1x1x32xf32, #tpu.memory_space<vmem>>, %arg2: memref<1x16x32xf32, #tpu.memory_space<vmem>>, %arg3: memref<1x16x32xf32, #tpu.memory_space<vmem>>, %arg4: memref<1x16x32xf32, #tpu.memory_space<vmem>>, %arg5: memref<1x1x16xi32, #tpu.memory_space<vmem>>, %arg6: memref<32x32xf32, #tpu.memory_space<vmem>>, %arg7: memref<1x1x16xf32, #tpu.memory_space<vmem>>) attributes {dimension_semantics = [#tpu.dimension_semantics<parallel>], iteration_bounds = array<i64: 2>, scalar_prefetch = 0 : i64, scratch_operands = 0 : i64, tpu.core_type = #tpu.core_type<tc>, window_params = [{transform_indices = @transform_0, window_bounds = array<i64: 1, 1, 32>}, {transform_indices = @transform_1, window_bounds = array<i64: 1, 16, 32>}, {transform_indices = @transform_2, window_bounds = array<i64: 1, 16, 32>}, {transform_indices = @transform_3, window_bounds = array<i64: 1, 16, 32>}, {transform_indices = @transform_4, window_bounds = array<i64: 1, 1, 16>}, {pipeline_mode = #tpu.pipeline_mode<synchronous>, transform_indices = @transform_5, window_bounds = array<i64: 32, 32>}, {transform_indices = @transform_6, window_bounds = array<i64: 1, 1, 16>}]} {
    %c0 = arith.constant 0 : index
    %c0_0 = arith.constant 0 : index
    %c0_1 = arith.constant 0 : index
    %0 = vector.load %arg1[%c0, %c0_0, %c0_1] : memref<1x1x32xf32, #tpu.memory_space<vmem>>, vector<1x1x32xf32>
    %1 = vector.shape_cast %0 : vector<1x1x32xf32> to vector<1x32xf32>
    %c0_2 = arith.constant 0 : index
    %c0_3 = arith.constant 0 : index
    %c0_4 = arith.constant 0 : index
    %2 = vector.load %arg2[%c0_2, %c0_3, %c0_4] : memref<1x16x32xf32, #tpu.memory_space<vmem>>, vector<1x16x32xf32>
    %3 = vector.shape_cast %2 : vector<1x16x32xf32> to vector<16x32xf32>
    %c0_5 = arith.constant 0 : index
    %c0_6 = arith.constant 0 : index
    %c0_7 = arith.constant 0 : index
    %4 = vector.load %arg3[%c0_5, %c0_6, %c0_7] : memref<1x16x32xf32, #tpu.memory_space<vmem>>, vector<1x16x32xf32>
    %5 = vector.shape_cast %4 : vector<1x16x32xf32> to vector<16x32xf32>
    %c0_8 = arith.constant 0 : index
    %c0_9 = arith.constant 0 : index
    %c0_10 = arith.constant 0 : index
    %6 = vector.load %arg4[%c0_8, %c0_9, %c0_10] : memref<1x16x32xf32, #tpu.memory_space<vmem>>, vector<1x16x32xf32>
    %7 = vector.shape_cast %6 : vector<1x16x32xf32> to vector<16x32xf32>
    %c0_11 = arith.constant 0 : index
    %c0_12 = arith.constant 0 : index
    %c0_13 = arith.constant 0 : index
    %8 = vector.load %arg5[%c0_11, %c0_12, %c0_13] : memref<1x1x16xi32, #tpu.memory_space<vmem>>, vector<1x1x16xi32>
    %9 = vector.shape_cast %8 : vector<1x1x16xi32> to vector<1x16xi32>
    %c0_i32 = arith.constant 0 : i32
    %10 = vector.broadcast %c0_i32 : i32 to vector<1x16xi32>
    %11 = arith.cmpi ne, %9, %10 : vector<1x16xi32>
    %c0_14 = arith.constant 0 : index
    %c0_15 = arith.constant 0 : index
    %12 = vector.load %arg6[%c0_14, %c0_15] : memref<32x32xf32, #tpu.memory_space<vmem>>, vector<32x32xf32>
    %cst = arith.constant 0.000000e+00 : f32
    %13 = vector.broadcast %cst : f32 to vector<1x32xf32>
    %14 = vector.extract_strided_slice %1 {offsets = [0, 0], sizes = [1, 8], strides = [1, 1]} : vector<1x32xf32> to vector<1x8xf32>
    %15 = vector.extract_strided_slice %3 {offsets = [0, 0], sizes = [16, 8], strides = [1, 1]} : vector<16x32xf32> to vector<16x8xf32>
    %16 = vector.extract_strided_slice %5 {offsets = [0, 0], sizes = [16, 8], strides = [1, 1]} : vector<16x32xf32> to vector<16x8xf32>
    %cst_16 = arith.constant dense<0.000000e+00> : vector<1x16xf32>
    %17 = tpu.matmul %14, %15, %cst_16 {dimension_numbers = #tpu.dot_dimension_numbers<[1], [1], [0], [0], [0, 0, 1, 0], [], []>} : vector<1x8xf32>, vector<16x8xf32>, vector<1x16xf32> -> vector<1x16xf32>
    %cst_17 = arith.constant 0.353553385 : f32
    %18 = vector.broadcast %cst_17 : f32 to vector<1x16xf32>
    %19 = arith.mulf %17, %18 : vector<1x16xf32>
    %cst_18 = arith.constant -1.000000e+30 : f32
    %20 = vector.broadcast %cst_18 : f32 to vector<1x16xf32>
    %21 = arith.select %11, %19, %20 : vector<1x16xi1>, vector<1x16xf32>
    %cst_19 = arith.constant dense<0xFF800000> : vector<1xf32>
    %22 = vector.multi_reduction <maximumf>, %21, %cst_19 [1] : vector<1x16xf32> to vector<1xf32>
    %23 = vector.shape_cast %22 : vector<1xf32> to vector<1x1xf32>
    %24 = vector.broadcast %23 : vector<1x1xf32> to vector<1x16xf32>
    %25 = arith.subf %21, %24 : vector<1x16xf32>
    %26 = math.exp %25 : vector<1x16xf32>
    %cst_20 = arith.constant dense<0.000000e+00> : vector<1xf32>
    %27 = vector.multi_reduction <add>, %26, %cst_20 [1] : vector<1x16xf32> to vector<1xf32>
    %28 = vector.shape_cast %27 : vector<1xf32> to vector<1x1xf32>
    %29 = vector.broadcast %28 : vector<1x1xf32> to vector<1x16xf32>
    %30 = arith.divf %26, %29 : vector<1x16xf32>
    %cst_21 = arith.constant dense<0.000000e+00> : vector<1x8xf32>
    %31 = tpu.matmul %30, %16, %cst_21 {dimension_numbers = #tpu.dot_dimension_numbers<[1], [0], [0], [1], [0, 0, 1, 1], [], []>} : vector<1x16xf32>, vector<16x8xf32>, vector<1x8xf32> -> vector<1x8xf32>
    %32 = vector.extract_strided_slice %12 {offsets = [0, 0], sizes = [8, 32], strides = [1, 1]} : vector<32x32xf32> to vector<8x32xf32>
    %cst_22 = arith.constant dense<0.000000e+00> : vector<1x32xf32>
    %33 = tpu.matmul %31, %32, %cst_22 {dimension_numbers = #tpu.dot_dimension_numbers<[1], [0], [0], [1], [0, 0, 1, 1], [], []>} : vector<1x8xf32>, vector<8x32xf32>, vector<1x32xf32> -> vector<1x32xf32>
    %34 = arith.addf %13, %33 : vector<1x32xf32>
    %35 = vector.extract_strided_slice %1 {offsets = [0, 8], sizes = [1, 8], strides = [1, 1]} : vector<1x32xf32> to vector<1x8xf32>
    %36 = vector.extract_strided_slice %3 {offsets = [0, 8], sizes = [16, 8], strides = [1, 1]} : vector<16x32xf32> to vector<16x8xf32>
    %37 = vector.extract_strided_slice %5 {offsets = [0, 8], sizes = [16, 8], strides = [1, 1]} : vector<16x32xf32> to vector<16x8xf32>
    %cst_23 = arith.constant dense<0.000000e+00> : vector<1x16xf32>
    %38 = tpu.matmul %35, %36, %cst_23 {dimension_numbers = #tpu.dot_dimension_numbers<[1], [1], [0], [0], [0, 0, 1, 0], [], []>} : vector<1x8xf32>, vector<16x8xf32>, vector<1x16xf32> -> vector<1x16xf32>
    %cst_24 = arith.constant 0.353553385 : f32
    %39 = vector.broadcast %cst_24 : f32 to vector<1x16xf32>
    %40 = arith.mulf %38, %39 : vector<1x16xf32>
    %cst_25 = arith.constant -1.000000e+30 : f32
    %41 = vector.broadcast %cst_25 : f32 to vector<1x16xf32>
    %42 = arith.select %11, %40, %41 : vector<1x16xi1>, vector<1x16xf32>
    %cst_26 = arith.constant dense<0xFF800000> : vector<1xf32>
    %43 = vector.multi_reduction <maximumf>, %42, %cst_26 [1] : vector<1x16xf32> to vector<1xf32>
    %44 = vector.shape_cast %43 : vector<1xf32> to vector<1x1xf32>
    %45 = vector.broadcast %44 : vector<1x1xf32> to vector<1x16xf32>
    %46 = arith.subf %42, %45 : vector<1x16xf32>
    %47 = math.exp %46 : vector<1x16xf32>
    %cst_27 = arith.constant dense<0.000000e+00> : vector<1xf32>
    %48 = vector.multi_reduction <add>, %47, %cst_27 [1] : vector<1x16xf32> to vector<1xf32>
    %49 = vector.shape_cast %48 : vector<1xf32> to vector<1x1xf32>
    %50 = vector.broadcast %49 : vector<1x1xf32> to vector<1x16xf32>
    %51 = arith.divf %47, %50 : vector<1x16xf32>
    %cst_28 = arith.constant dense<0.000000e+00> : vector<1x8xf32>
    %52 = tpu.matmul %51, %37, %cst_28 {dimension_numbers = #tpu.dot_dimension_numbers<[1], [0], [0], [1], [0, 0, 1, 1], [], []>} : vector<1x16xf32>, vector<16x8xf32>, vector<1x8xf32> -> vector<1x8xf32>
    %53 = vector.extract_strided_slice %12 {offsets = [8, 0], sizes = [8, 32], strides = [1, 1]} : vector<32x32xf32> to vector<8x32xf32>
    %cst_29 = arith.constant dense<0.000000e+00> : vector<1x32xf32>
    %54 = tpu.matmul %52, %53, %cst_29 {dimension_numbers = #tpu.dot_dimension_numbers<[1], [0], [0], [1], [0, 0, 1, 1], [], []>} : vector<1x8xf32>, vector<8x32xf32>, vector<1x32xf32> -> vector<1x32xf32>
    %55 = arith.addf %34, %54 : vector<1x32xf32>
    %56 = vector.extract_strided_slice %1 {offsets = [0, 16], sizes = [1, 8], strides = [1, 1]} : vector<1x32xf32> to vector<1x8xf32>
    %57 = vector.extract_strided_slice %3 {offsets = [0, 16], sizes = [16, 8], strides = [1, 1]} : vector<16x32xf32> to vector<16x8xf32>
    %58 = vector.extract_strided_slice %5 {offsets = [0, 16], sizes = [16, 8], strides = [1, 1]} : vector<16x32xf32> to vector<16x8xf32>
    %cst_30 = arith.constant dense<0.000000e+00> : vector<1x16xf32>
    %59 = tpu.matmul %56, %57, %cst_30 {dimension_numbers = #tpu.dot_dimension_numbers<[1], [1], [0], [0], [0, 0, 1, 0], [], []>} : vector<1x8xf32>, vector<16x8xf32>, vector<1x16xf32> -> vector<1x16xf32>
    %cst_31 = arith.constant 0.353553385 : f32
    %60 = vector.broadcast %cst_31 : f32 to vector<1x16xf32>
    %61 = arith.mulf %59, %60 : vector<1x16xf32>
    %cst_32 = arith.constant -1.000000e+30 : f32
    %62 = vector.broadcast %cst_32 : f32 to vector<1x16xf32>
    %63 = arith.select %11, %61, %62 : vector<1x16xi1>, vector<1x16xf32>
    %cst_33 = arith.constant dense<0xFF800000> : vector<1xf32>
    %64 = vector.multi_reduction <maximumf>, %63, %cst_33 [1] : vector<1x16xf32> to vector<1xf32>
    %65 = vector.shape_cast %64 : vector<1xf32> to vector<1x1xf32>
    %66 = vector.broadcast %65 : vector<1x1xf32> to vector<1x16xf32>
    %67 = arith.subf %63, %66 : vector<1x16xf32>
    %68 = math.exp %67 : vector<1x16xf32>
    %cst_34 = arith.constant dense<0.000000e+00> : vector<1xf32>
    %69 = vector.multi_reduction <add>, %68, %cst_34 [1] : vector<1x16xf32> to vector<1xf32>
    %70 = vector.shape_cast %69 : vector<1xf32> to vector<1x1xf32>
    %71 = vector.broadcast %70 : vector<1x1xf32> to vector<1x16xf32>
    %72 = arith.divf %68, %71 : vector<1x16xf32>
    %cst_35 = arith.constant dense<0.000000e+00> : vector<1x8xf32>
    %73 = tpu.matmul %72, %58, %cst_35 {dimension_numbers = #tpu.dot_dimension_numbers<[1], [0], [0], [1], [0, 0, 1, 1], [], []>} : vector<1x16xf32>, vector<16x8xf32>, vector<1x8xf32> -> vector<1x8xf32>
    %74 = vector.extract_strided_slice %12 {offsets = [16, 0], sizes = [8, 32], strides = [1, 1]} : vector<32x32xf32> to vector<8x32xf32>
    %cst_36 = arith.constant dense<0.000000e+00> : vector<1x32xf32>
    %75 = tpu.matmul %73, %74, %cst_36 {dimension_numbers = #tpu.dot_dimension_numbers<[1], [0], [0], [1], [0, 0, 1, 1], [], []>} : vector<1x8xf32>, vector<8x32xf32>, vector<1x32xf32> -> vector<1x32xf32>
    %76 = arith.addf %55, %75 : vector<1x32xf32>
    %77 = vector.extract_strided_slice %1 {offsets = [0, 24], sizes = [1, 8], strides = [1, 1]} : vector<1x32xf32> to vector<1x8xf32>
    %78 = vector.extract_strided_slice %3 {offsets = [0, 24], sizes = [16, 8], strides = [1, 1]} : vector<16x32xf32> to vector<16x8xf32>
    %79 = vector.extract_strided_slice %5 {offsets = [0, 24], sizes = [16, 8], strides = [1, 1]} : vector<16x32xf32> to vector<16x8xf32>
    %cst_37 = arith.constant dense<0.000000e+00> : vector<1x16xf32>
    %80 = tpu.matmul %77, %78, %cst_37 {dimension_numbers = #tpu.dot_dimension_numbers<[1], [1], [0], [0], [0, 0, 1, 0], [], []>} : vector<1x8xf32>, vector<16x8xf32>, vector<1x16xf32> -> vector<1x16xf32>
    %cst_38 = arith.constant 0.353553385 : f32
    %81 = vector.broadcast %cst_38 : f32 to vector<1x16xf32>
    %82 = arith.mulf %80, %81 : vector<1x16xf32>
    %cst_39 = arith.constant -1.000000e+30 : f32
    %83 = vector.broadcast %cst_39 : f32 to vector<1x16xf32>
    %84 = arith.select %11, %82, %83 : vector<1x16xi1>, vector<1x16xf32>
    %cst_40 = arith.constant dense<0xFF800000> : vector<1xf32>
    %85 = vector.multi_reduction <maximumf>, %84, %cst_40 [1] : vector<1x16xf32> to vector<1xf32>
    %86 = vector.shape_cast %85 : vector<1xf32> to vector<1x1xf32>
    %87 = vector.broadcast %86 : vector<1x1xf32> to vector<1x16xf32>
    %88 = arith.subf %84, %87 : vector<1x16xf32>
    %89 = math.exp %88 : vector<1x16xf32>
    %cst_41 = arith.constant dense<0.000000e+00> : vector<1xf32>
    %90 = vector.multi_reduction <add>, %89, %cst_41 [1] : vector<1x16xf32> to vector<1xf32>
    %91 = vector.shape_cast %90 : vector<1xf32> to vector<1x1xf32>
    %92 = vector.broadcast %91 : vector<1x1xf32> to vector<1x16xf32>
    %93 = arith.divf %89, %92 : vector<1x16xf32>
    %cst_42 = arith.constant dense<0.000000e+00> : vector<1x8xf32>
    %94 = tpu.matmul %93, %79, %cst_42 {dimension_numbers = #tpu.dot_dimension_numbers<[1], [0], [0], [1], [0, 0, 1, 1], [], []>} : vector<1x16xf32>, vector<16x8xf32>, vector<1x8xf32> -> vector<1x8xf32>
    %95 = vector.extract_strided_slice %12 {offsets = [24, 0], sizes = [8, 32], strides = [1, 1]} : vector<32x32xf32> to vector<8x32xf32>
    %cst_43 = arith.constant dense<0.000000e+00> : vector<1x32xf32>
    %96 = tpu.matmul %94, %95, %cst_43 {dimension_numbers = #tpu.dot_dimension_numbers<[1], [0], [0], [1], [0, 0, 1, 1], [], []>} : vector<1x8xf32>, vector<8x32xf32>, vector<1x32xf32> -> vector<1x32xf32>
    %97 = arith.addf %76, %96 : vector<1x32xf32>
    %cst_44 = arith.constant dense<0.000000e+00> : vector<1x16xf32>
    %98 = tpu.matmul %97, %7, %cst_44 {dimension_numbers = #tpu.dot_dimension_numbers<[1], [1], [0], [0], [0, 0, 1, 0], [], []>} : vector<1x32xf32>, vector<16x32xf32>, vector<1x16xf32> -> vector<1x16xf32>
    %cst_45 = arith.constant 0.176776692 : f32
    %99 = vector.broadcast %cst_45 : f32 to vector<1x16xf32>
    %100 = arith.mulf %98, %99 : vector<1x16xf32>
    %c0_46 = arith.constant 0 : index
    %c0_47 = arith.constant 0 : index
    %c0_48 = arith.constant 0 : index
    %101 = vector.load %arg7[%c0_46, %c0_47, %c0_48] : memref<1x1x16xf32, #tpu.memory_space<vmem>>, vector<1x1x16xf32>
    %102 = vector.shape_cast %101 : vector<1x1x16xf32> to vector<1x16xf32>
    %103 = vector.shape_cast %100 : vector<1x16xf32> to vector<1x1x16xf32>
    tpu.vector_store %arg7[%c0_46, %c0_47, %c0_48], %103 {strides = array<i32>} : memref<1x1x16xf32, #tpu.memory_space<vmem>>, vector<1x1x16xf32>,
    return
  }
  func.func @transform_0(%arg0: i32) -> (i32, i32, i32) {
    %c0_i32 = arith.constant 0 : i32
    %c0_i32_0 = arith.constant 0 : i32
    %c0_i32_1 = arith.constant 0 : i32
    return %arg0, %c0_i32, %c0_i32_0 : i32, i32, i32
  }
  func.func @transform_1(%arg0: i32) -> (i32, i32, i32) {
    %c0_i32 = arith.constant 0 : i32
    %c0_i32_0 = arith.constant 0 : i32
    %c0_i32_1 = arith.constant 0 : i32
    return %arg0, %c0_i32, %c0_i32_0 : i32, i32, i32
  }
  func.func @transform_2(%arg0: i32) -> (i32, i32, i32) {
    %c0_i32 = arith.constant 0 : i32
    %c0_i32_0 = arith.constant 0 : i32
    %c0_i32_1 = arith.constant 0 : i32
    return %arg0, %c0_i32, %c0_i32_0 : i32, i32, i32
  }
  func.func @transform_3(%arg0: i32) -> (i32, i32, i32) {
    %c0_i32 = arith.constant 0 : i32
    %c0_i32_0 = arith.constant 0 : i32
    %c0_i32_1 = arith.constant 0 : i32
    return %arg0, %c0_i32, %c0_i32_0 : i32, i32, i32
  }
  func.func @transform_4(%arg0: i32) -> (i32, i32, i32) {
    %c0_i32 = arith.constant 0 : i32
    %c0_i32_0 = arith.constant 0 : i32
    %c0_i32_1 = arith.constant 0 : i32
    return %arg0, %c0_i32, %c0_i32_0 : i32, i32, i32
  }
  func.func @transform_5(%arg0: i32) -> (i32, i32) {
    %c0_i32 = arith.constant 0 : i32
    %c0_i32_0 = arith.constant 0 : i32
    %c0_i32_1 = arith.constant 0 : i32
    return %c0_i32, %c0_i32_0 : i32, i32
  }
  func.func @transform_6(%arg0: i32) -> (i32, i32, i32) {
    %c0_i32 = arith.constant 0 : i32
    %c0_i32_0 = arith.constant 0 : i32
    %c0_i32_1 = arith.constant 0 : i32
    return %arg0, %c0_i32, %c0_i32_0 : i32, i32, i32
  }
}

</mosaic_0001>

<llo_original>
// kernel: tpu_custom_call.1
$region0: #{tpu_custom_call.1}
  #allocation0 [shape = 'u32[]', space=smem, size = 0x4, offset = 0x4, fixed_abs, tag = 'smem constant byte address 0x4 - core index']
  #allocation1 [shape = 'u32[144,128]{1,0:T(1,128)}', space=vmem, size = 0x12000, scoped, tag = 'internal scratch']
  %s0 = inlined_call_operand.hbm [shape: f32[2,1,32], index: 0, kind: input, shape index: {}]
  %s1 = inlined_call_operand.hbm [shape: f32[2,16,32], index: 1, kind: input, shape index: {}]
  %s2 = inlined_call_operand.hbm [shape: f32[2,16,32], index: 2, kind: input, shape index: {}]
  %s3 = inlined_call_operand.hbm [shape: f32[2,16,32], index: 3, kind: input, shape index: {}]
  %s4 = inlined_call_operand.vmem [shape: s32[2,1,16], index: 4, kind: input, shape index: {}]
  %s5 = inlined_call_operand.hbm [shape: f32[32,32], index: 5, kind: input, shape index: {}]
  %s6 = inlined_call_operand.hbm [shape: f32[2,1,16], index: 6, kind: output, shape index: {}]
  %s7 = sld [smem:[#allocation0]]
  $region77: #{tpu_custom_call.1} parent=0
    _
  %s9 = ssub.s32 1, %s7
  %s10 = scalar_select 0, %s9, %s7
  $region1: #{tpu_custom_call.1} parent=0
    #allocation2 [shape = 'u8[1024]{0}', space=vmem, size = 0x400, scoped, tag = 'input window, operand 0']
    #allocation3 [shape = 's32[2]{0}', space=sflag, size = 0x8, scoped, tag = 'scoped memory for tpu_custom_call.1']
    #allocation4 [shape = 's32[2]{0}', space=sflag, size = 0x8, scoped, tag = 'scoped memory for tpu_custom_call.1']
    #allocation5 [shape = 'u8[16384]{0}', space=vmem, size = 0x4000, scoped, tag = 'input window, operand 1']
    #allocation6 [shape = 's32[2]{0}', space=sflag, size = 0x8, scoped, tag = 'scoped memory for tpu_custom_call.1']
    #allocation7 [shape = 'u8[16384]{0}', space=vmem, size = 0x4000, scoped, tag = 'input window, operand 2']
    #allocation8 [shape = 'u8[16384]{0}', space=vmem, size = 0x4000, scoped, tag = 'input window, operand 3']
    #allocation9 [shape = 's32[2]{0}', space=sflag, size = 0x8, scoped, tag = 'scoped memory for tpu_custom_call.1']
    #allocation10 [shape = 'u8[16384]{0}', space=vmem, size = 0x4000, scoped, tag = 'input window, operand 5, single buffered']
    #allocation11 [shape = 'u8[1024]{0}', space=vmem, size = 0x400, scoped, tag = 'output window, operand 0']
    %11 = vsyncpa [#allocation3], 0
    %s12 = scalar_lea.sflag [#allocation3], 1
    %13 = vsyncpa %s12, 0
    %14 = vsyncpa [#allocation6], 0
    %s15 = scalar_lea.sflag [#allocation6], 1
    %16 = vsyncpa %s15, 0
    %17 = vsyncpa [#allocation9], 0
    %s18 = scalar_lea.sflag [#allocation9], 1
    %19 = vsyncpa %s18, 0
    %20 = vsyncpa [#allocation4], 0
    %s21 = scalar_lea.sflag [#allocation4], 1
    %22 = vsyncpa %s21, 0
    loop: start=0, step=1, limit=4
    $region2: #{tpu_custom_call.1} parent=1 // loop_pre_header
      _
    $region3: #{tpu_custom_call.1} parent=1 // loop_header
      %s24 = sphi 0, %s28
      %p25 = scmp.ge.s32.totalorder %s24, 4
      %s34 = sphi 0, %s36
      %s37 = sphi 0, %s34
      %s38 = sphi 0, %s37
      %s54 = sphi 0, %s38
      %s60 = sphi 0, %s62
      %s63 = sphi 0, %s60
      %s64 = sphi 0, %s63
      %s80 = sphi 0, %s64
      %s86 = sphi 0, %s88
      %s89 = sphi 0, %s86
      %s90 = sphi 0, %s89
      %s106 = sphi 0, %s90
      %s112 = sphi 0, %s114
      %s115 = sphi 0, %s112
      %s116 = sphi 0, %s115
      %s132 = sphi 0, %s116
      %s138 = sphi 0, %s140
      %s141 = sphi 0, %s138
      %s142 = sphi 0, %s141
      %s158 = sphi 0, %s142
      %s162 = sphi 0, %s162
      %s164 = sphi 0, %s162
      %s165 = sphi 0, %s164
      %s179 = sphi 0, %s165
      %s185 = sphi 0, %s187
      %s188 = sphi 0, %s185
      %s189 = sphi 0, %s188
      %s205 = sphi 0, %s189
    $region4: #{tpu_custom_call.1} parent=1 // loop_header_branch
      %27 = sbr.rel (%p25) target = $region8
    $region5: #{tpu_custom_call.1} parent=1 // loop_body
      %s29 = ssub.s32 %s24, 1
      %s30 = ssub.s32 %s24, 2
      %s31 = sadd.s32 %s24, 1
      %s32 = ssub.s32 %s24, %s31
      %p33 = scmp.eq.s32.totalorder %s32, 0
      %s35 = sadd.s32 %s34, 1
      %s36 = scalar_select %p33, %s34, %s35
      %p39 = pneg %p33
      %p40 = scmp.eq.s32.totalorder %s24, 1
      %p41 = por %p39, %p40
      %p42 = scmp.ne.s32.totalorder %s34, %s37
      %p43 = scmp.eq.s32.totalorder %s24, 0
      %p44 = por %p42, %p43
      %p45 = scmp.ne.s32.totalorder %s34, %s37
      %p46 = scmp.eq.s32.totalorder %s29, 1
      %p47 = por %p45, %p46
      %p48 = scmp.ne.s32.totalorder %s37, %s38
      %p49 = scmp.eq.s32.totalorder %s29, 0
      %p50 = por %p48, %p49
      %p51 = scmp.ne.s32.totalorder %s37, %s38
      %p52 = scmp.eq.s32.totalorder %s30, 1
      %p53 = por %p51, %p52
      %p55 = scmp.ne.s32.totalorder %s38, %s54
      %p56 = scmp.eq.s32.totalorder %s30, 0
      %p57 = por %p55, %p56
      %s58 = ssub.s32 %s24, %s31
      %p59 = scmp.eq.s32.totalorder %s58, 0
      %s61 = sadd.s32 %s60, 1
      %s62 = scalar_select %p59, %s60, %s61
      %p65 = pneg %p59
      %p66 = scmp.eq.s32.totalorder %s24, 1
      %p67 = por %p65, %p66
      %p68 = scmp.ne.s32.totalorder %s60, %s63
      %p69 = scmp.eq.s32.totalorder %s24, 0
      %p70 = por %p68, %p69
      %p71 = scmp.ne.s32.totalorder %s60, %s63
      %p72 = scmp.eq.s32.totalorder %s29, 1
      %p73 = por %p71, %p72
      %p74 = scmp.ne.s32.totalorder %s63, %s64
      %p75 = scmp.eq.s32.totalorder %s29, 0
      %p76 = por %p74, %p75
      %p77 = scmp.ne.s32.totalorder %s63, %s64
      %p78 = scmp.eq.s32.totalorder %s30, 1
      %p79 = por %p77, %p78
      %p81 = scmp.ne.s32.totalorder %s64, %s80
      %p82 = scmp.eq.s32.totalorder %s30, 0
      %p83 = por %p81, %p82
      %s84 = ssub.s32 %s24, %s31
      %p85 = scmp.eq.s32.totalorder %s84, 0
      %s87 = sadd.s32 %s86, 1
      %s88 = scalar_select %p85, %s86, %s87
      %p91 = pneg %p85
      %p92 = scmp.eq.s32.totalorder %s24, 1
      %p93 = por %p91, %p92
      %p94 = scmp.ne.s32.totalorder %s86, %s89
      %p95 = scmp.eq.s32.totalorder %s24, 0
      %p96 = por %p94, %p95
      %p97 = scmp.ne.s32.totalorder %s86, %s89
      %p98 = scmp.eq.s32.totalorder %s29, 1
      %p99 = por %p97, %p98
      %p100 = scmp.ne.s32.totalorder %s89, %s90
      %p101 = scmp.eq.s32.totalorder %s29, 0
      %p102 = por %p100, %p101
      %p103 = scmp.ne.s32.totalorder %s89, %s90
      %p104 = scmp.eq.s32.totalorder %s30, 1
      %p105 = por %p103, %p104
      %p107 = scmp.ne.s32.totalorder %s90, %s106
      %p108 = scmp.eq.s32.totalorder %s30, 0
      %p109 = por %p107, %p108
      %s110 = ssub.s32 %s24, %s31
      %p111 = scmp.eq.s32.totalorder %s110, 0
      %s113 = sadd.s32 %s112, 1
      %s114 = scalar_select %p111, %s112, %s113
      %p117 = pneg %p111
      %p118 = scmp.eq.s32.totalorder %s24, 1
      %p119 = por %p117, %p118
      %p120 = scmp.ne.s32.totalorder %s112, %s115
      %p121 = scmp.eq.s32.totalorder %s24, 0
      %p122 = por %p120, %p121
      %p123 = scmp.ne.s32.totalorder %s112, %s115
      %p124 = scmp.eq.s32.totalorder %s29, 1
      %p125 = por %p123, %p124
      %p126 = scmp.ne.s32.totalorder %s115, %s116
      %p127 = scmp.eq.s32.totalorder %s29, 0
      %p128 = por %p126, %p127
      %p129 = scmp.ne.s32.totalorder %s115, %s116
      %p130 = scmp.eq.s32.totalorder %s30, 1
      %p131 = por %p129, %p130
      %p133 = scmp.ne.s32.totalorder %s116, %s132
      %p134 = scmp.eq.s32.totalorder %s30, 0
      %p135 = por %p133, %p134
      %s136 = ssub.s32 %s24, %s31
      %p137 = scmp.eq.s32.totalorder %s136, 0
      %s139 = sadd.s32 %s138, 1
      %s140 = scalar_select %p137, %s138, %s139
      %p143 = pneg %p137
      %p144 = scmp.eq.s32.totalorder %s24, 1
      %p145 = por %p143, %p144
      %p146 = scmp.ne.s32.totalorder %s138, %s141
      %p147 = scmp.eq.s32.totalorder %s24, 0
      %p148 = por %p146, %p147
      %p149 = scmp.ne.s32.totalorder %s138, %s141
      %p150 = scmp.eq.s32.totalorder %s29, 1
      %p151 = por %p149, %p150
      %p152 = scmp.ne.s32.totalorder %s141, %s142
      %p153 = scmp.eq.s32.totalorder %s29, 0
      %p154 = por %p152, %p153
      %p155 = scmp.ne.s32.totalorder %s141, %s142
      %p156 = scmp.eq.s32.totalorder %s30, 1
      %p157 = por %p155, %p156
      %p159 = scmp.ne.s32.totalorder %s142, %s158
      %p160 = scmp.eq.s32.totalorder %s30, 0
      %p161 = por %p159, %p160
      %s163 = sadd.s32 %s162, 1
      %p166 = scmp.eq.s32.totalorder %s24, 1
      %p167 = scmp.ne.s32.totalorder %s162, %s164
      %p168 = scmp.eq.s32.totalorder %s24, 0
      %p169 = por %p167, %p168
      %p170 = scmp.ne.s32.totalorder %s162, %s164
      %p171 = scmp.eq.s32.totalorder %s29, 1
      %p172 = por %p170, %p171
      %p173 = scmp.ne.s32.totalorder %s164, %s165
      %p174 = scmp.eq.s32.totalorder %s29, 0
      %p175 = por %p173, %p174
      %p176 = scmp.ne.s32.totalorder %s164, %s165
      %p177 = scmp.eq.s32.totalorder %s30, 1
      %p178 = por %p176, %p177
      %p180 = scmp.ne.s32.totalorder %s165, %s179
      %p181 = scmp.eq.s32.totalorder %s30, 0
      %p182 = por %p180, %p181
      %s183 = ssub.s32 %s24, %s31
      %p184 = scmp.eq.s32.totalorder %s183, 0
      %s186 = sadd.s32 %s185, 1
      %s187 = scalar_select %p184, %s185, %s186
      %p190 = pneg %p184
      %p191 = scmp.eq.s32.totalorder %s24, 1
      %p192 = por %p190, %p191
      %p193 = scmp.ne.s32.totalorder %s185, %s188
      %p194 = scmp.eq.s32.totalorder %s24, 0
      %p195 = por %p193, %p194
      %p196 = scmp.ne.s32.totalorder %s185, %s188
      %p197 = scmp.eq.s32.totalorder %s29, 1
      %p198 = por %p196, %p197
      %p199 = scmp.ne.s32.totalorder %s188, %s189
      %p200 = scmp.eq.s32.totalorder %s29, 0
      %p201 = por %p199, %p200
      %p202 = scmp.ne.s32.totalorder %s188, %s189
      %p203 = scmp.eq.s32.totalorder %s30, 1
      %p204 = por %p202, %p203
      %p206 = scmp.ne.s32.totalorder %s189, %s205
      %p207 = scmp.eq.s32.totalorder %s30, 0
      %p208 = por %p206, %p207
      %p209 = scmp.le.s32.totalorder 1, %s24
      %p210 = scmp.lt.s32.totalorder %s24, 3
      %p211 = pnand %p209, %p210
      %p212 = pneg %p211
      // Predicated region
      $region9: #{tpu_custom_call.1} parent=5 // pred_check
        _
      $region10: #{tpu_custom_call.1} parent=5 // pred_check_branch
        %214 = sbr.rel (%p211) target = $region12
      $region11: #{tpu_custom_call.1} parent=5 // pred_region
        %s215 = ssub.s32 %s24, 1
        // Predicated region
        $region13: #{tpu_custom_call.1} parent=11 // pred_check
          %p216 = pneg %p175
        $region14: #{tpu_custom_call.1} parent=11 // pred_check_branch
          %218 = sbr.rel (%p216) target = $region16
        $region15: #{tpu_custom_call.1} parent=11 // pred_region
          %s220 = ssub.s32 512, 512
          %221 = vsyncadd [#allocation9], %s220
          %s222 = sshll.u32 [#allocation10], 4
          %s223 = int_to_ptr.vmem [resolvable:$true] %s222
          %228 = dma.hbm_to_vmem [thread:$0]  %s5, 512, %s223, [#allocation9], 128, 128, 8
        $region16: #{tpu_custom_call.1} parent=11 // pred_fallthru
          _
      $region12: #{tpu_custom_call.1} parent=5 // pred_fallthru
        _
      %p229 = scmp.lt.s32.totalorder %s24, 2
      // Predicated region
      $region17: #{tpu_custom_call.1} parent=5 // pred_check
        %p230 = pneg %p229
      $region18: #{tpu_custom_call.1} parent=5 // pred_check_branch
        %232 = sbr.rel (%p230) target = $region20
      $region19: #{tpu_custom_call.1} parent=5 // pred_region
        // Predicated region
        $region21: #{tpu_custom_call.1} parent=19 // pred_check
          %p233 = pneg %p44
        $region22: #{tpu_custom_call.1} parent=19 // pred_check_branch
          %235 = sbr.rel (%p233) target = $region24
        $region23: #{tpu_custom_call.1} parent=19 // pred_region
          %s236 = sand.u32 %s34, 1
          %s237 = scalar_lea.sflag [#allocation3], %s236
          %s238 = sand.u32 %s34, 1
          %s239 = scalar_lea.vmem [#allocation2], %s238
          %s241 = ssub.s32 16, 16
          %242 = vsyncadd %s237, %s241
          %s243 = smul.addr %s24, 16
          %s244 = scalar_lea.hbm %s0, %s243
          %s246 = sshll.u32 %s239, 4
          %s247 = int_to_ptr.vmem [resolvable:$true] %s246
          %249 = dma.hbm_to_vmem [thread:$0]  %s244, 16, %s247, %s237
        $region24: #{tpu_custom_call.1} parent=19 // pred_fallthru
          _
        // Predicated region
        $region25: #{tpu_custom_call.1} parent=19 // pred_check
          %p250 = pneg %p70
        $region26: #{tpu_custom_call.1} parent=19 // pred_check_branch
          %252 = sbr.rel (%p250) target = $region28
        $region27: #{tpu_custom_call.1} parent=19 // pred_region
          %s253 = sand.u32 %s24, 1
          %s254 = scalar_lea.sflag [#allocation6], %s253
          %s255 = sand.u32 %s60, 1
          %s256 = smul.addr %s255, 16
          %s257 = scalar_lea.vmem [#allocation5], %s256
          %s259 = ssub.s32 256, 256
          %260 = vsyncadd %s254, %s259
          %s261 = smul.addr %s24, 2
          %s262 = smul.addr %s261, 128
          %s263 = scalar_lea.hbm %s1, %s262
          %s264 = sshll.u32 %s257, 4
          %s265 = int_to_ptr.vmem [resolvable:$true] %s264
          %270 = dma.hbm_to_vmem [thread:$0]  %s263, 256, %s265, %s254, 128, 128, 8
        $region28: #{tpu_custom_call.1} parent=19 // pred_fallthru
          _
        // Predicated region
        $region29: #{tpu_custom_call.1} parent=19 // pred_check
          %p271 = pneg %p96
        $region30: #{tpu_custom_call.1} parent=19 // pred_check_branch
          %273 = sbr.rel (%p271) target = $region32
        $region31: #{tpu_custom_call.1} parent=19 // pred_region
          %s274 = sand.u32 %s24, 1
          %s275 = scalar_lea.sflag [#allocation6], %s274
          %s276 = sand.u32 %s86, 1
          %s277 = smul.addr %s276, 16
          %s278 = scalar_lea.vmem [#allocation7], %s277
          %s280 = ssub.s32 256, 256
          %281 = vsyncadd %s275, %s280
          %s282 = smul.addr %s24, 2
          %s283 = smul.addr %s282, 128
          %s284 = scalar_lea.hbm %s2, %s283
          %s285 = sshll.u32 %s278, 4
          %s286 = int_to_ptr.vmem [resolvable:$true] %s285
          %291 = dma.hbm_to_vmem [thread:$0]  %s284, 256, %s286, %s275, 128, 128, 8
        $region32: #{tpu_custom_call.1} parent=19 // pred_fallthru
          _
        // Predicated region
        $region33: #{tpu_custom_call.1} parent=19 // pred_check
          %p292 = pneg %p122
        $region34: #{tpu_custom_call.1} parent=19 // pred_check_branch
          %294 = sbr.rel (%p292) target = $region36
        $region35: #{tpu_custom_call.1} parent=19 // pred_region
          %s295 = sand.u32 %s24, 1
          %s296 = scalar_lea.sflag [#allocation9], %s295
          %s297 = sand.u32 %s112, 1
          %s298 = smul.addr %s297, 16
          %s299 = scalar_lea.vmem [#allocation8], %s298
          %s301 = ssub.s32 256, 256
          %302 = vsyncadd %s296, %s301
          %s303 = smul.addr %s24, 2
          %s304 = smul.addr %s303, 128
          %s305 = scalar_lea.hbm %s3, %s304
          %s306 = sshll.u32 %s299, 4
          %s307 = int_to_ptr.vmem [resolvable:$true] %s306
          %312 = dma.hbm_to_vmem [thread:$0]  %s305, 256, %s307, %s296, 128, 128, 8
        $region36: #{tpu_custom_call.1} parent=19 // pred_fallthru
          _
        // Predicated region
        $region37: #{tpu_custom_call.1} parent=19 // pred_check
          %p313 = pneg %p148
        $region38: #{tpu_custom_call.1} parent=19 // pred_check_branch
          %315 = sbr.rel (%p313) target = $region40
        $region39: #{tpu_custom_call.1} parent=19 // pred_region
          %p316 = scmp.lt.s32.totalorder %s24, 1
          %s317 = scalar_select %p316, %s24, 1
          %s318 = scalar_lea.vmem %s4, %s317
        $region40: #{tpu_custom_call.1} parent=19 // pred_fallthru
          _
      $region20: #{tpu_custom_call.1} parent=5 // pred_fallthru
        _
      %p319 = scmp.le.s32.totalorder 1, %s24
      %p320 = scmp.lt.s32.totalorder %s24, 3
      %p321 = pnand %p319, %p320
      %p322 = pneg %p321
      // Predicated region
      $region41: #{tpu_custom_call.1} parent=5 // pred_check
        _
      $region42: #{tpu_custom_call.1} parent=5 // pred_check_branch
        %324 = sbr.rel (%p321) target = $region44
      $region43: #{tpu_custom_call.1} parent=5 // pred_region
        %s325 = ssub.s32 %s24, 1
        %s326 = sand.u32 %s37, 1
        %s327 = scalar_lea.sflag [#allocation3], %s326
        %s328 = sand.u32 %s37, 1
        %s329 = scalar_lea.vmem [#allocation2], %s328
        // Predicated region
        $region45: #{tpu_custom_call.1} parent=43 // pred_check
          %p330 = pneg %p50
        $region46: #{tpu_custom_call.1} parent=43 // pred_check_branch
          %332 = sbr.rel (%p330) target = $region48
        $region47: #{tpu_custom_call.1} parent=43 // pred_region
          %333 = dma.done %s327, 16
        $region48: #{tpu_custom_call.1} parent=43 // pred_fallthru
          _
        %s334 = sand.u32 %s29, 1
        %s335 = scalar_lea.sflag [#allocation6], %s334
        %s336 = sand.u32 %s63, 1
        %s337 = smul.addr %s336, 16
        %s338 = scalar_lea.vmem [#allocation5], %s337
        // Predicated region
        $region49: #{tpu_custom_call.1} parent=43 // pred_check
          %p339 = pneg %p76
        $region50: #{tpu_custom_call.1} parent=43 // pred_check_branch
          %341 = sbr.rel (%p339) target = $region52
        $region51: #{tpu_custom_call.1} parent=43 // pred_region
          %342 = dma.done %s335, 256
        $region52: #{tpu_custom_call.1} parent=43 // pred_fallthru
          _
        %s343 = sand.u32 %s29, 1
        %s344 = scalar_lea.sflag [#allocation6], %s343
        %s345 = sand.u32 %s89, 1
        %s346 = smul.addr %s345, 16
        %s347 = scalar_lea.vmem [#allocation7], %s346
        // Predicated region
        $region53: #{tpu_custom_call.1} parent=43 // pred_check
          %p348 = pneg %p102
        $region54: #{tpu_custom_call.1} parent=43 // pred_check_branch
          %350 = sbr.rel (%p348) target = $region56
        $region55: #{tpu_custom_call.1} parent=43 // pred_region
          %351 = dma.done %s344, 256
        $region56: #{tpu_custom_call.1} parent=43 // pred_fallthru
          _
        %s352 = sand.u32 %s29, 1
        %s353 = scalar_lea.sflag [#allocation9], %s352
        %s354 = sand.u32 %s115, 1
        %s355 = smul.addr %s354, 16
        %s356 = scalar_lea.vmem [#allocation8], %s355
        // Predicated region
        $region57: #{tpu_custom_call.1} parent=43 // pred_check
          %p357 = pneg %p128
        $region58: #{tpu_custom_call.1} parent=43 // pred_check_branch
          %359 = sbr.rel (%p357) target = $region60
        $region59: #{tpu_custom_call.1} parent=43 // pred_region
          %360 = dma.done %s353, 256
        $region60: #{tpu_custom_call.1} parent=43 // pred_fallthru
          _
        // Predicated region
        $region61: #{tpu_custom_call.1} parent=43 // pred_check
          %p361 = pneg %p175
        $region62: #{tpu_custom_call.1} parent=43 // pred_check_branch
          %363 = sbr.rel (%p361) target = $region64
        $region63: #{tpu_custom_call.1} parent=43 // pred_region
          %364 = dma.done [#allocation9], 512
        $region64: #{tpu_custom_call.1} parent=43 // pred_fallthru
          _
        %s365 = sand.u32 %s37, 1
        %s366 = scalar_lea.sflag [#allocation3], %s365
        %s367 = sand.u32 %s37, 1
        %s368 = scalar_lea.vmem [#allocation2], %s367
        %p369 = pneg %p50
        %p370 = pneg %p47
        %s371 = sand.u32 %s29, 1
        %s372 = scalar_lea.sflag [#allocation6], %s371
        %s373 = sand.u32 %s63, 1
        %s374 = smul.addr %s373, 16
        %s375 = scalar_lea.vmem [#allocation5], %s374
        %p376 = pneg %p76
        %p377 = pneg %p73
        %s378 = sand.u32 %s29, 1
        %s379 = scalar_lea.sflag [#allocation6], %s378
        %s380 = sand.u32 %s89, 1
        %s381 = smul.addr %s380, 16
        %s382 = scalar_lea.vmem [#allocation7], %s381
        %p383 = pneg %p102
        %p384 = pneg %p99
        %s385 = sand.u32 %s29, 1
        %s386 = scalar_lea.sflag [#allocation9], %s385
        %s387 = sand.u32 %s115, 1
        %s388 = smul.addr %s387, 16
        %s389 = scalar_lea.vmem [#allocation8], %s388
        %p390 = pneg %p128
        %p391 = pneg %p125
        %p392 = scmp.lt.s32.totalorder %s29, 1
        %s393 = scalar_select %p392, %s29, 1
        %s394 = scalar_lea.vmem %s4, %s393
        %p395 = pneg %p154
        %p396 = pneg %p151
        %p397 = pneg %p175
        %p398 = pneg %p172
        %p399 = pneg %p201
        %p400 = pneg %p198
        %s401 = sand.u32 %s188, 1
        %s402 = scalar_lea.sflag [#allocation4], %s401
        %s403 = sand.u32 %s188, 1
        %s404 = scalar_lea.vmem [#allocation11], %s403
        %p405 = scmp.lt.s32.totalorder %s29, 1
        %s406 = scalar_select %p405, %s29, 1
        %s407 = scalar_lea.vmem %s4, %s406
        %v408 = vld [vmem:[%s329] sm:$0x1]
        %v409 = vld [vmem:[%s338] sm:$0xff]
        %v410 = vld [vmem:[%s338 + $0x8] sm:$0xff]
        %v411 = vld [vmem:[%s347] sm:$0xff]
        %v412 = vld [vmem:[%s347 + $0x8] sm:$0xff]
        %v413 = vld [vmem:[%s356] sm:$0xff]
        %v414 = vld [vmem:[%s356 + $0x8] sm:$0xff]
        %v415 = vld [vmem:[%s407] sm:$0x1]
        %vm416 = vcmp.ne.s32.totalorder %v415, 0
        %v417 = vld [vmem:[#allocation10] sm:$0xff]
        %v418 = vld [vmem:[#allocation10 + $0x8] sm:$0xff]
        %v419 = vld [vmem:[#allocation10 + $0x10] sm:$0xff]
        %v420 = vld [vmem:[#allocation10 + $0x18] sm:$0xff]
        %vm421 = vcmask 64512
        %v423 = vsel %vm421, %v408, 0
        %v426 = vsel %vm421, %v409, 0
        %v429 = vsel %vm421, %v410, 0
        %431 = vmatprep.subr.mxu0 0.0
        %432 = vmatpush1.xpose.msra.mxu0 %v426
        %433 = vmatprep.subr.mxu0 0.0
        %434 = vmatpush1.xpose.msra.mxu0 %v429
        %435 = vmatprep.subr.mxu0 0.0
        %436 = vmatpush1.xpose.msra.mxu0 0.0
        %437 = vmatprep.subr.mxu0 0.0
        %438 = vmatpush1.xpose.msra.mxu0 0.0
        %439 = vmatprep.subr.mxu0 0.0
        %440 = vmatpush1.xpose.msra.mxu0 0.0
        %441 = vmatprep.subr.mxu0 0.0
        %442 = vmatpush1.xpose.msra.mxu0 0.0
        %443 = vmatprep.subr.mxu0 0.0
        %444 = vmatpush1.xpose.msra.mxu0 0.0
        %445 = vmatprep.subr.mxu0 0.0
        %446 = vmatpush1.xpose.msra.mxu0 0.0
        %447 = vmatprep.subr.mxu0 0.0
        %448 = vmatpush1.xpose.msra.mxu0 0.0
        %449 = vmatprep.subr.mxu0 0.0
        %450 = vmatpush1.xpose.msra.mxu0 0.0
        %451 = vmatprep.subr.mxu0 0.0
        %452 = vmatpush1.xpose.msra.mxu0 0.0
        %453 = vmatprep.subr.mxu0 0.0
        %454 = vmatpush1.xpose.msra.mxu0 0.0
        %455 = vmatprep.subr.mxu0 0.0
        %456 = vmatpush1.xpose.msra.mxu0 0.0
        %457 = vmatprep.subr.mxu0 0.0
        %458 = vmatpush1.xpose.msra.mxu0 0.0
        %459 = vmatprep.subr.mxu0 0.0
        %460 = vmatpush1.xpose.msra.mxu0 0.0
        %461 = vmatprep.subr.mxu0 0.0
        %462 = vmatpush1.xpose.msra.mxu0 0.0
        %463 = vmatprep.subr.mxu0 0.0
        %464 = vmatpush1.xpose.msra.mxu0 0.0
        %465 = vmatprep.subr.mxu0 0.0
        %466 = vmatpush1.xpose.msra.mxu0 0.0
        %467 = vmatprep.subr.mxu0 0.0
        %468 = vmatpush1.xpose.msra.mxu0 0.0
        %469 = vmatprep.subr.mxu0 0.0
        %470 = vmatpush1.xpose.msra.mxu0 0.0
        %471 = vmatprep.subr.mxu0 0.0
        %472 = vmatpush1.xpose.msra.mxu0 0.0
        %473 = vmatprep.subr.mxu0 0.0
        %474 = vmatpush1.xpose.msra.mxu0 0.0
        %475 = vmatprep.subr.mxu0 0.0
        %476 = vmatpush1.xpose.msra.mxu0 0.0
        %477 = vmatprep.subr.mxu0 0.0
        %478 = vmatpush1.xpose.msra.mxu0 0.0
        %479 = vmatprep.subr.mxu0 0.0
        %480 = vmatpush1.xpose.msra.mxu0 0.0
        %481 = vmatprep.subr.mxu0 0.0
        %482 = vmatpush1.xpose.msra.mxu0 0.0
        %483 = vmatprep.subr.mxu0 0.0
        %484 = vmatpush1.xpose.msra.mxu0 0.0
        %485 = vmatprep.subr.mxu0 0.0
        %486 = vmatpush1.xpose.msra.mxu0 0.0
        %487 = vmatprep.subr.mxu0 0.0
        %488 = vmatpush1.xpose.msra.mxu0 0.0
        %489 = vmatprep.subr.mxu0 0.0
        %490 = vmatpush1.xpose.msra.mxu0 0.0
        %491 = vmatprep.subr.mxu0 0.0
        %492 = vmatpush1.xpose.msra.mxu0 0.0
        %493 = vmatprep.subr.mxu0 0.0
        %494 = vmatpush1.xpose.msra.mxu0 0.0
        %495 = vmatprep.mubr.f32.mxu0 0.0
        %496 = vmatmul.mubr.f32.gmra.mrb[0].mxu0 %v423
        %v497 = vpop.f32.mrb[0].mxu0
        %v498 = vadd.f32 0.0, %v497
        %v499 = vpop.f32.mrb[0].mxu0
        %500 = vdwg.mxu0
        %v501 = vmul.f32 %v498, 0.35355338
        %v502 = vsel %vm416, %v501, -1e+30
        %vm503 = vcmask 122880
        %v504 = vsel %vm503, %v502, -inf
        %505 = vmax.xlane.f32.xlu0 %v504
        %v506 = vpop.xlane.xlu0 %505
        %v507 = vsub.f32 %v502, %v506
        %v508 = vmul.f32 %v507, 1.442695
        %v509 = vpow.pop %v508
        %v510 = vsel %vm503, %v509, 0.0
        %511 = vadd.xlane.f32.xlu0 %v510
        %v512 = vpop.xlane.xlu0 %511
        %v513 = vrcp.pop %v512
        %v514 = vmul.f32 %v509, %v513
        %vm515 = vcmask 130048
        %v517 = vsel %vm515, %v514, 0
        %519 = vmatprep.subr.mxu0 0.0
        %520 = vmatpush1.msra.mxu0 %v411
        %521 = vmatprep.subr.mxu0 0.0
        %522 = vmatpush1.msra.mxu0 %v412
        %523 = vmatprep.subr.mxu0 0.0
        %524 = vmatpush1.msra.mxu0 0.0
        %525 = vmatprep.subr.mxu0 0.0
        %526 = vmatpush1.msra.mxu0 0.0
        %527 = vmatprep.subr.mxu0 0.0
        %528 = vmatpush1.msra.mxu0 0.0
        %529 = vmatprep.subr.mxu0 0.0
        %530 = vmatpush1.msra.mxu0 0.0
        %531 = vmatprep.subr.mxu0 0.0
        %532 = vmatpush1.msra.mxu0 0.0
        %533 = vmatprep.subr.mxu0 0.0
        %534 = vmatpush1.msra.mxu0 0.0
        %535 = vmatprep.subr.mxu0 0.0
        %536 = vmatpush1.msra.mxu0 0.0
        %537 = vmatprep.subr.mxu0 0.0
        %538 = vmatpush1.msra.mxu0 0.0
        %539 = vmatprep.subr.mxu0 0.0
        %540 = vmatpush1.msra.mxu0 0.0
        %541 = vmatprep.subr.mxu0 0.0
        %542 = vmatpush1.msra.mxu0 0.0
        %543 = vmatprep.subr.mxu0 0.0
        %544 = vmatpush1.msra.mxu0 0.0
        %545 = vmatprep.subr.mxu0 0.0
        %546 = vmatpush1.msra.mxu0 0.0
        %547 = vmatprep.subr.mxu0 0.0
        %548 = vmatpush1.msra.mxu0 0.0
        %549 = vmatprep.subr.mxu0 0.0
        %550 = vmatpush1.msra.mxu0 0.0
        %551 = vmatprep.subr.mxu0 0.0
        %552 = vmatpush1.msra.mxu0 0.0
        %553 = vmatprep.subr.mxu0 0.0
        %554 = vmatpush1.msra.mxu0 0.0
        %555 = vmatprep.subr.mxu0 0.0
        %556 = vmatpush1.msra.mxu0 0.0
        %557 = vmatprep.subr.mxu0 0.0
        %558 = vmatpush1.msra.mxu0 0.0
        %559 = vmatprep.subr.mxu0 0.0
        %560 = vmatpush1.msra.mxu0 0.0
        %561 = vmatprep.subr.mxu0 0.0
        %562 = vmatpush1.msra.mxu0 0.0
        %563 = vmatprep.subr.mxu0 0.0
        %564 = vmatpush1.msra.mxu0 0.0
        %565 = vmatprep.subr.mxu0 0.0
        %566 = vmatpush1.msra.mxu0 0.0
        %567 = vmatprep.subr.mxu0 0.0
        %568 = vmatpush1.msra.mxu0 0.0
        %569 = vmatprep.subr.mxu0 0.0
        %570 = vmatpush1.msra.mxu0 0.0
        %571 = vmatprep.subr.mxu0 0.0
        %572 = vmatpush1.msra.mxu0 0.0
        %573 = vmatprep.subr.mxu0 0.0
        %574 = vmatpush1.msra.mxu0 0.0
        %575 = vmatprep.subr.mxu0 0.0
        %576 = vmatpush1.msra.mxu0 0.0
        %577 = vmatprep.subr.mxu0 0.0
        %578 = vmatpush1.msra.mxu0 0.0
        %579 = vmatprep.subr.mxu0 0.0
        %580 = vmatpush1.msra.mxu0 0.0
        %581 = vmatprep.subr.mxu0 0.0
        %582 = vmatpush1.msra.mxu0 0.0
        %583 = vmatprep.mubr.f32.mxu0 0.0
        %584 = vmatmul.mubr.f32.gmra.mrb[0].mxu0 %v517
        %v585 = vpop.f32.mrb[0].mxu0
        %v586 = vadd.f32 0.0, %v585
        %v587 = vpop.f32.mrb[0].mxu0
        %588 = vdwg.mxu0
        %v589 = vlaneseq
        %v590 = vshrl.u32 %v589, 7
        %v591 = vsub.s32 0, %v590
        %v592 = vrot.slane %v408, %v591
        %593 = vrot.lane.b32.xlu0 %v592, 120
        %v594 = vpop.permute.xlu0 %593
        %595 = vrot.lane.b32.xlu0 %v409, 120
        %v596 = vpop.permute.xlu0 %595
        %597 = vrot.lane.b32.xlu0 %v410, 120
        %v598 = vpop.permute.xlu0 %597
        %v599 = vsel %vm421, %v594, 0
        %v601 = vsel %vm421, %v596, 0
        %v603 = vsel %vm421, %v598, 0
        %605 = vmatprep.subr.mxu0 0.0
        %606 = vmatpush1.xpose.msra.mxu0 %v601
        %607 = vmatprep.subr.mxu0 0.0
        %608 = vmatpush1.xpose.msra.mxu0 %v603
        %609 = vmatprep.subr.mxu0 0.0
        %610 = vmatpush1.xpose.msra.mxu0 0.0
        %611 = vmatprep.subr.mxu0 0.0
        %612 = vmatpush1.xpose.msra.mxu0 0.0
        %613 = vmatprep.subr.mxu0 0.0
        %614 = vmatpush1.xpose.msra.mxu0 0.0
        %615 = vmatprep.subr.mxu0 0.0
        %616 = vmatpush1.xpose.msra.mxu0 0.0
        %617 = vmatprep.subr.mxu0 0.0
        %618 = vmatpush1.xpose.msra.mxu0 0.0
        %619 = vmatprep.subr.mxu0 0.0
        %620 = vmatpush1.xpose.msra.mxu0 0.0
        %621 = vmatprep.subr.mxu0 0.0
        %622 = vmatpush1.xpose.msra.mxu0 0.0
        %623 = vmatprep.subr.mxu0 0.0
        %624 = vmatpush1.xpose.msra.mxu0 0.0
        %625 = vmatprep.subr.mxu0 0.0
        %626 = vmatpush1.xpose.msra.mxu0 0.0
        %627 = vmatprep.subr.mxu0 0.0
        %628 = vmatpush1.xpose.msra.mxu0 0.0
        %629 = vmatprep.subr.mxu0 0.0
        %630 = vmatpush1.xpose.msra.mxu0 0.0
        %631 = vmatprep.subr.mxu0 0.0
        %632 = vmatpush1.xpose.msra.mxu0 0.0
        %633 = vmatprep.subr.mxu0 0.0
        %634 = vmatpush1.xpose.msra.mxu0 0.0
        %635 = vmatprep.subr.mxu0 0.0
        %636 = vmatpush1.xpose.msra.mxu0 0.0
        %637 = vmatprep.subr.mxu0 0.0
        %638 = vmatpush1.xpose.msra.mxu0 0.0
        %639 = vmatprep.subr.mxu0 0.0
        %640 = vmatpush1.xpose.msra.mxu0 0.0
        %641 = vmatprep.subr.mxu0 0.0
        %642 = vmatpush1.xpose.msra.mxu0 0.0
        %643 = vmatprep.subr.mxu0 0.0
        %644 = vmatpush1.xpose.msra.mxu0 0.0
        %645 = vmatprep.subr.mxu0 0.0
        %646 = vmatpush1.xpose.msra.mxu0 0.0
        %647 = vmatprep.subr.mxu0 0.0
        %648 = vmatpush1.xpose.msra.mxu0 0.0
        %649 = vmatprep.subr.mxu0 0.0
        %650 = vmatpush1.xpose.msra.mxu0 0.0
        %651 = vmatprep.subr.mxu0 0.0
        %652 = vmatpush1.xpose.msra.mxu0 0.0
        %653 = vmatprep.subr.mxu0 0.0
        %654 = vmatpush1.xpose.msra.mxu0 0.0
        %655 = vmatprep.subr.mxu0 0.0
        %656 = vmatpush1.xpose.msra.mxu0 0.0
        %657 = vmatprep.subr.mxu0 0.0
        %658 = vmatpush1.xpose.msra.mxu0 0.0
        %659 = vmatprep.subr.mxu0 0.0
        %660 = vmatpush1.xpose.msra.mxu0 0.0
        %661 = vmatprep.subr.mxu0 0.0
        %662 = vmatpush1.xpose.msra.mxu0 0.0
        %663 = vmatprep.subr.mxu0 0.0
        %664 = vmatpush1.xpose.msra.mxu0 0.0
        %665 = vmatprep.subr.mxu0 0.0
        %666 = vmatpush1.xpose.msra.mxu0 0.0
        %667 = vmatprep.subr.mxu0 0.0
        %668 = vmatpush1.xpose.msra.mxu0 0.0
        %669 = vmatprep.mubr.f32.mxu0 0.0
        %670 = vmatmul.mubr.f32.gmra.mrb[0].mxu0 %v599
        %v671 = vpop.f32.mrb[0].mxu0
        %v672 = vadd.f32 0.0, %v671
        %v673 = vpop.f32.mrb[0].mxu0
        %674 = vdwg.mxu0
        %v675 = vmul.f32 %v672, 0.35355338
        %v676 = vsel %vm416, %v675, -1e+30
        %v677 = vsel %vm503, %v676, -inf
        %678 = vmax.xlane.f32.xlu0 %v677
        %v679 = vpop.xlane.xlu0 %678
        %v680 = vsub.f32 %v676, %v679
        %v681 = vmul.f32 %v680, 1.442695
        %v682 = vpow.pop %v681
        %v683 = vsel %vm503, %v682, 0.0
        %684 = vadd.xlane.f32.xlu0 %v683
        %v685 = vpop.xlane.xlu0 %684
        %v686 = vrcp.pop %v685
        %v687 = vmul.f32 %v682, %v686
        %690 = vrot.lane.b32.xlu0 %v411, 120
        %v691 = vpop.permute.xlu0 %690
        %692 = vrot.lane.b32.xlu0 %v412, 120
        %v693 = vpop.permute.xlu0 %692
        %v697 = vsel %vm515, %v687, 0
        %699 = vmatprep.subr.mxu0 0.0
        %700 = vmatpush1.msra.mxu0 %v691
        %701 = vmatprep.subr.mxu0 0.0
        %702 = vmatpush1.msra.mxu0 %v693
        %703 = vmatprep.subr.mxu0 0.0
        %704 = vmatpush1.msra.mxu0 0.0
        %705 = vmatprep.subr.mxu0 0.0
        %706 = vmatpush1.msra.mxu0 0.0
        %707 = vmatprep.subr.mxu0 0.0
        %708 = vmatpush1.msra.mxu0 0.0
        %709 = vmatprep.subr.mxu0 0.0
        %710 = vmatpush1.msra.mxu0 0.0
        %711 = vmatprep.subr.mxu0 0.0
        %712 = vmatpush1.msra.mxu0 0.0
        %713 = vmatprep.subr.mxu0 0.0
        %714 = vmatpush1.msra.mxu0 0.0
        %715 = vmatprep.subr.mxu0 0.0
        %716 = vmatpush1.msra.mxu0 0.0
        %717 = vmatprep.subr.mxu0 0.0
        %718 = vmatpush1.msra.mxu0 0.0
        %719 = vmatprep.subr.mxu0 0.0
        %720 = vmatpush1.msra.mxu0 0.0
        %721 = vmatprep.subr.mxu0 0.0
        %722 = vmatpush1.msra.mxu0 0.0
        %723 = vmatprep.subr.mxu0 0.0
        %724 = vmatpush1.msra.mxu0 0.0
        %725 = vmatprep.subr.mxu0 0.0
        %726 = vmatpush1.msra.mxu0 0.0
        %727 = vmatprep.subr.mxu0 0.0
        %728 = vmatpush1.msra.mxu0 0.0
        %729 = vmatprep.subr.mxu0 0.0
        %730 = vmatpush1.msra.mxu0 0.0
        %731 = vmatprep.subr.mxu0 0.0
        %732 = vmatpush1.msra.mxu0 0.0
        %733 = vmatprep.subr.mxu0 0.0
        %734 = vmatpush1.msra.mxu0 0.0
        %735 = vmatprep.subr.mxu0 0.0
        %736 = vmatpush1.msra.mxu0 0.0
        %737 = vmatprep.subr.mxu0 0.0
        %738 = vmatpush1.msra.mxu0 0.0
        %739 = vmatprep.subr.mxu0 0.0
        %740 = vmatpush1.msra.mxu0 0.0
        %741 = vmatprep.subr.mxu0 0.0
        %742 = vmatpush1.msra.mxu0 0.0
        %743 = vmatprep.subr.mxu0 0.0
        %744 = vmatpush1.msra.mxu0 0.0
        %745 = vmatprep.subr.mxu0 0.0
        %746 = vmatpush1.msra.mxu0 0.0
        %747 = vmatprep.subr.mxu0 0.0
        %748 = vmatpush1.msra.mxu0 0.0
        %749 = vmatprep.subr.mxu0 0.0
        %750 = vmatpush1.msra.mxu0 0.0
        %751 = vmatprep.subr.mxu0 0.0
        %752 = vmatpush1.msra.mxu0 0.0
        %753 = vmatprep.subr.mxu0 0.0
        %754 = vmatpush1.msra.mxu0 0.0
        %755 = vmatprep.subr.mxu0 0.0
        %756 = vmatpush1.msra.mxu0 0.0
        %757 = vmatprep.subr.mxu0 0.0
        %758 = vmatpush1.msra.mxu0 0.0
        %759 = vmatprep.subr.mxu0 0.0
        %760 = vmatpush1.msra.mxu0 0.0
        %761 = vmatprep.subr.mxu0 0.0
        %762 = vmatpush1.msra.mxu0 0.0
        %763 = vmatprep.mubr.f32.mxu0 0.0
        %764 = vmatmul.mubr.f32.gmra.mrb[0].mxu0 %v697
        %v765 = vpop.f32.mrb[0].mxu0
        %v766 = vadd.f32 0.0, %v765
        %v767 = vpop.f32.mrb[0].mxu0
        %768 = vdwg.mxu0
        %v770 = vsel %vm421, %v766, 0
        %772 = vmatprep.subr.mxu0 0.0
        %773 = vmatpush1.msra.mxu0 %v418
        %774 = vmatprep.subr.mxu0 0.0
        %775 = vmatpush1.msra.mxu0 0.0
        %776 = vmatprep.subr.mxu0 0.0
        %777 = vmatpush1.msra.mxu0 0.0
        %778 = vmatprep.subr.mxu0 0.0
        %779 = vmatpush1.msra.mxu0 0.0
        %780 = vmatprep.subr.mxu0 0.0
        %781 = vmatpush1.msra.mxu0 0.0
        %782 = vmatprep.subr.mxu0 0.0
        %783 = vmatpush1.msra.mxu0 0.0
        %784 = vmatprep.subr.mxu0 0.0
        %785 = vmatpush1.msra.mxu0 0.0
        %786 = vmatprep.subr.mxu0 0.0
        %787 = vmatpush1.msra.mxu0 0.0
        %788 = vmatprep.subr.mxu0 0.0
        %789 = vmatpush1.msra.mxu0 0.0
        %790 = vmatprep.subr.mxu0 0.0
        %791 = vmatpush1.msra.mxu0 0.0
        %792 = vmatprep.subr.mxu0 0.0
        %793 = vmatpush1.msra.mxu0 0.0
        %794 = vmatprep.subr.mxu0 0.0
        %795 = vmatpush1.msra.mxu0 0.0
        %796 = vmatprep.subr.mxu0 0.0
        %797 = vmatpush1.msra.mxu0 0.0
        %798 = vmatprep.subr.mxu0 0.0
        %799 = vmatpush1.msra.mxu0 0.0
        %800 = vmatprep.subr.mxu0 0.0
        %801 = vmatpush1.msra.mxu0 0.0
        %802 = vmatprep.subr.mxu0 0.0
        %803 = vmatpush1.msra.mxu0 0.0
        %804 = vmatprep.subr.mxu0 0.0
        %805 = vmatpush1.msra.mxu0 0.0
        %806 = vmatprep.subr.mxu0 0.0
        %807 = vmatpush1.msra.mxu0 0.0
        %808 = vmatprep.subr.mxu0 0.0
        %809 = vmatpush1.msra.mxu0 0.0
        %810 = vmatprep.subr.mxu0 0.0
        %811 = vmatpush1.msra.mxu0 0.0
        %812 = vmatprep.subr.mxu0 0.0
        %813 = vmatpush1.msra.mxu0 0.0
        %814 = vmatprep.subr.mxu0 0.0
        %815 = vmatpush1.msra.mxu0 0.0
        %816 = vmatprep.subr.mxu0 0.0
        %817 = vmatpush1.msra.mxu0 0.0
        %818 = vmatprep.subr.mxu0 0.0
        %819 = vmatpush1.msra.mxu0 0.0
        %820 = vmatprep.subr.mxu0 0.0
        %821 = vmatpush1.msra.mxu0 0.0
        %822 = vmatprep.subr.mxu0 0.0
        %823 = vmatpush1.msra.mxu0 0.0
        %824 = vmatprep.subr.mxu0 0.0
        %825 = vmatpush1.msra.mxu0 0.0
        %826 = vmatprep.subr.mxu0 0.0
        %827 = vmatpush1.msra.mxu0 0.0
        %828 = vmatprep.subr.mxu0 0.0
        %829 = vmatpush1.msra.mxu0 0.0
        %830 = vmatprep.subr.mxu0 0.0
        %831 = vmatpush1.msra.mxu0 0.0
        %832 = vmatprep.subr.mxu0 0.0
        %833 = vmatpush1.msra.mxu0 0.0
        %834 = vmatprep.subr.mxu0 0.0
        %835 = vmatpush1.msra.mxu0 0.0
        %836 = vmatprep.mubr.f32.mxu0 0.0
        %837 = vmatmul.mubr.f32.gmra.mrb[0].mxu0 %v770
        %v838 = vpop.f32.mrb[0].mxu0
        %v839 = vadd.f32 0.0, %v838
        %v840 = vpop.f32.mrb[0].mxu0
        %841 = vdwg.mxu0
        %v843 = vsel %vm421, %v586, 0
        %845 = vmatprep.subr.mxu0 0.0
        %846 = vmatpush1.msra.mxu0 %v417
        %847 = vmatprep.subr.mxu0 0.0
        %848 = vmatpush1.msra.mxu0 0.0
        %849 = vmatprep.subr.mxu0 0.0
        %850 = vmatpush1.msra.mxu0 0.0
        %851 = vmatprep.subr.mxu0 0.0
        %852 = vmatpush1.msra.mxu0 0.0
        %853 = vmatprep.subr.mxu0 0.0
        %854 = vmatpush1.msra.mxu0 0.0
        %855 = vmatprep.subr.mxu0 0.0
        %856 = vmatpush1.msra.mxu0 0.0
        %857 = vmatprep.subr.mxu0 0.0
        %858 = vmatpush1.msra.mxu0 0.0
        %859 = vmatprep.subr.mxu0 0.0
        %860 = vmatpush1.msra.mxu0 0.0
        %861 = vmatprep.subr.mxu0 0.0
        %862 = vmatpush1.msra.mxu0 0.0
        %863 = vmatprep.subr.mxu0 0.0
        %864 = vmatpush1.msra.mxu0 0.0
        %865 = vmatprep.subr.mxu0 0.0
        %866 = vmatpush1.msra.mxu0 0.0
        %867 = vmatprep.subr.mxu0 0.0
        %868 = vmatpush1.msra.mxu0 0.0
        %869 = vmatprep.subr.mxu0 0.0
        %870 = vmatpush1.msra.mxu0 0.0
        %871 = vmatprep.subr.mxu0 0.0
        %872 = vmatpush1.msra.mxu0 0.0
        %873 = vmatprep.subr.mxu0 0.0
        %874 = vmatpush1.msra.mxu0 0.0
        %875 = vmatprep.subr.mxu0 0.0
        %876 = vmatpush1.msra.mxu0 0.0
        %877 = vmatprep.subr.mxu0 0.0
        %878 = vmatpush1.msra.mxu0 0.0
        %879 = vmatprep.subr.mxu0 0.0
        %880 = vmatpush1.msra.mxu0 0.0
        %881 = vmatprep.subr.mxu0 0.0
        %882 = vmatpush1.msra.mxu0 0.0
        %883 = vmatprep.subr.mxu0 0.0
        %884 = vmatpush1.msra.mxu0 0.0
        %885 = vmatprep.subr.mxu0 0.0
        %886 = vmatpush1.msra.mxu0 0.0
        %887 = vmatprep.subr.mxu0 0.0
        %888 = vmatpush1.msra.mxu0 0.0
        %889 = vmatprep.subr.mxu0 0.0
        %890 = vmatpush1.msra.mxu0 0.0
        %891 = vmatprep.subr.mxu0 0.0
        %892 = vmatpush1.msra.mxu0 0.0
        %893 = vmatprep.subr.mxu0 0.0
        %894 = vmatpush1.msra.mxu0 0.0
        %895 = vmatprep.subr.mxu0 0.0
        %896 = vmatpush1.msra.mxu0 0.0
        %897 = vmatprep.subr.mxu0 0.0
        %898 = vmatpush1.msra.mxu0 0.0
        %899 = vmatprep.subr.mxu0 0.0
        %900 = vmatpush1.msra.mxu0 0.0
        %901 = vmatprep.subr.mxu0 0.0
        %902 = vmatpush1.msra.mxu0 0.0
        %903 = vmatprep.subr.mxu0 0.0
        %904 = vmatpush1.msra.mxu0 0.0
        %905 = vmatprep.subr.mxu0 0.0
        %906 = vmatpush1.msra.mxu0 0.0
        %907 = vmatprep.subr.mxu0 0.0
        %908 = vmatpush1.msra.mxu0 0.0
        %909 = vmatprep.mubr.f32.mxu0 0.0
        %910 = vmatmul.mubr.f32.gmra.mrb[0].mxu0 %v843
        %v911 = vpop.f32.mrb[0].mxu0
        %v912 = vadd.f32 %v839, %v911
        %v913 = vpop.f32.mrb[0].mxu0
        %914 = vdwg.mxu0
        %915 = vrot.lane.b32.xlu0 %v592, 112
        %v916 = vpop.permute.xlu0 %915
        %917 = vrot.lane.b32.xlu0 %v409, 112
        %v918 = vpop.permute.xlu0 %917
        %919 = vrot.lane.b32.xlu0 %v410, 112
        %v920 = vpop.permute.xlu0 %919
        %v921 = vsel %vm421, %v916, 0
        %v923 = vsel %vm421, %v918, 0
        %v925 = vsel %vm421, %v920, 0
        %927 = vmatprep.subr.mxu0 0.0
        %928 = vmatpush1.xpose.msra.mxu0 %v923
        %929 = vmatprep.subr.mxu0 0.0
        %930 = vmatpush1.xpose.msra.mxu0 %v925
        %931 = vmatprep.subr.mxu0 0.0
        %932 = vmatpush1.xpose.msra.mxu0 0.0
        %933 = vmatprep.subr.mxu0 0.0
        %934 = vmatpush1.xpose.msra.mxu0 0.0
        %935 = vmatprep.subr.mxu0 0.0
        %936 = vmatpush1.xpose.msra.mxu0 0.0
        %937 = vmatprep.subr.mxu0 0.0
        %938 = vmatpush1.xpose.msra.mxu0 0.0
        %939 = vmatprep.subr.mxu0 0.0
        %940 = vmatpush1.xpose.msra.mxu0 0.0
        %941 = vmatprep.subr.mxu0 0.0
        %942 = vmatpush1.xpose.msra.mxu0 0.0
        %943 = vmatprep.subr.mxu0 0.0
        %944 = vmatpush1.xpose.msra.mxu0 0.0
        %945 = vmatprep.subr.mxu0 0.0
        %946 = vmatpush1.xpose.msra.mxu0 0.0
        %947 = vmatprep.subr.mxu0 0.0
        %948 = vmatpush1.xpose.msra.mxu0 0.0
        %949 = vmatprep.subr.mxu0 0.0
        %950 = vmatpush1.xpose.msra.mxu0 0.0
        %951 = vmatprep.subr.mxu0 0.0
        %952 = vmatpush1.xpose.msra.mxu0 0.0
        %953 = vmatprep.subr.mxu0 0.0
        %954 = vmatpush1.xpose.msra.mxu0 0.0
        %955 = vmatprep.subr.mxu0 0.0
        %956 = vmatpush1.xpose.msra.mxu0 0.0
        %957 = vmatprep.subr.mxu0 0.0
        %958 = vmatpush1.xpose.msra.mxu0 0.0
        %959 = vmatprep.subr.mxu0 0.0
        %960 = vmatpush1.xpose.msra.mxu0 0.0
        %961 = vmatprep.subr.mxu0 0.0
        %962 = vmatpush1.xpose.msra.mxu0 0.0
        %963 = vmatprep.subr.mxu0 0.0
        %964 = vmatpush1.xpose.msra.mxu0 0.0
        %965 = vmatprep.subr.mxu0 0.0
        %966 = vmatpush1.xpose.msra.mxu0 0.0
        %967 = vmatprep.subr.mxu0 0.0
        %968 = vmatpush1.xpose.msra.mxu0 0.0
        %969 = vmatprep.subr.mxu0 0.0
        %970 = vmatpush1.xpose.msra.mxu0 0.0
        %971 = vmatprep.subr.mxu0 0.0
        %972 = vmatpush1.xpose.msra.mxu0 0.0
        %973 = vmatprep.subr.mxu0 0.0
        %974 = vmatpush1.xpose.msra.mxu0 0.0
        %975 = vmatprep.subr.mxu0 0.0
        %976 = vmatpush1.xpose.msra.mxu0 0.0
        %977 = vmatprep.subr.mxu0 0.0
        %978 = vmatpush1.xpose.msra.mxu0 0.0
        %979 = vmatprep.subr.mxu0 0.0
        %980 = vmatpush1.xpose.msra.mxu0 0.0
        %981 = vmatprep.subr.mxu0 0.0
        %982 = vmatpush1.xpose.msra.mxu0 0.0
        %983 = vmatprep.subr.mxu0 0.0
        %984 = vmatpush1.xpose.msra.mxu0 0.0
        %985 = vmatprep.subr.mxu0 0.0
        %986 = vmatpush1.xpose.msra.mxu0 0.0
        %987 = vmatprep.subr.mxu0 0.0
        %988 = vmatpush1.xpose.msra.mxu0 0.0
        %989 = vmatprep.subr.mxu0 0.0
        %990 = vmatpush1.xpose.msra.mxu0 0.0
        %991 = vmatprep.mubr.f32.mxu0 0.0
        %992 = vmatmul.mubr.f32.gmra.mrb[0].mxu0 %v921
        %v993 = vpop.f32.mrb[0].mxu0
        %v994 = vadd.f32 0.0, %v993
        %v995 = vpop.f32.mrb[0].mxu0
        %996 = vdwg.mxu0
        %v997 = vmul.f32 %v994, 0.35355338
        %v998 = vsel %vm416, %v997, -1e+30
        %v999 = vsel %vm503, %v998, -inf
        %1000 = vmax.xlane.f32.xlu0 %v999
        %v1001 = vpop.xlane.xlu0 %1000
        %v1002 = vsub.f32 %v998, %v1001
        %v1003 = vmul.f32 %v1002, 1.442695
        %v1004 = vpow.pop %v1003
        %v1005 = vsel %vm503, %v1004, 0.0
        %1006 = vadd.xlane.f32.xlu0 %v1005
        %v1007 = vpop.xlane.xlu0 %1006
        %v1008 = vrcp.pop %v1007
        %v1009 = vmul.f32 %v1004, %v1008
        %1010 = vrot.lane.b32.xlu0 %v411, 112
        %v1011 = vpop.permute.xlu0 %1010
        %1012 = vrot.lane.b32.xlu0 %v412, 112
        %v1013 = vpop.permute.xlu0 %1012
        %v1017 = vsel %vm515, %v1009, 0
        %1019 = vmatprep.subr.mxu0 0.0
        %1020 = vmatpush1.msra.mxu0 %v1011
        %1021 = vmatprep.subr.mxu0 0.0
        %1022 = vmatpush1.msra.mxu0 %v1013
        %1023 = vmatprep.subr.mxu0 0.0
        %1024 = vmatpush1.msra.mxu0 0.0
        %1025 = vmatprep.subr.mxu0 0.0
        %1026 = vmatpush1.msra.mxu0 0.0
        %1027 = vmatprep.subr.mxu0 0.0
        %1028 = vmatpush1.msra.mxu0 0.0
        %1029 = vmatprep.subr.mxu0 0.0
        %1030 = vmatpush1.msra.mxu0 0.0
        %1031 = vmatprep.subr.mxu0 0.0
        %1032 = vmatpush1.msra.mxu0 0.0
        %1033 = vmatprep.subr.mxu0 0.0
        %1034 = vmatpush1.msra.mxu0 0.0
        %1035 = vmatprep.subr.mxu0 0.0
        %1036 = vmatpush1.msra.mxu0 0.0
        %1037 = vmatprep.subr.mxu0 0.0
        %1038 = vmatpush1.msra.mxu0 0.0
        %1039 = vmatprep.subr.mxu0 0.0
        %1040 = vmatpush1.msra.mxu0 0.0
        %1041 = vmatprep.subr.mxu0 0.0
        %1042 = vmatpush1.msra.mxu0 0.0
        %1043 = vmatprep.subr.mxu0 0.0
        %1044 = vmatpush1.msra.mxu0 0.0
        %1045 = vmatprep.subr.mxu0 0.0
        %1046 = vmatpush1.msra.mxu0 0.0
        %1047 = vmatprep.subr.mxu0 0.0
        %1048 = vmatpush1.msra.mxu0 0.0
        %1049 = vmatprep.subr.mxu0 0.0
        %1050 = vmatpush1.msra.mxu0 0.0
        %1051 = vmatprep.subr.mxu0 0.0
        %1052 = vmatpush1.msra.mxu0 0.0
        %1053 = vmatprep.subr.mxu0 0.0
        %1054 = vmatpush1.msra.mxu0 0.0
        %1055 = vmatprep.subr.mxu0 0.0
        %1056 = vmatpush1.msra.mxu0 0.0
        %1057 = vmatprep.subr.mxu0 0.0
        %1058 = vmatpush1.msra.mxu0 0.0
        %1059 = vmatprep.subr.mxu0 0.0
        %1060 = vmatpush1.msra.mxu0 0.0
        %1061 = vmatprep.subr.mxu0 0.0
        %1062 = vmatpush1.msra.mxu0 0.0
        %1063 = vmatprep.subr.mxu0 0.0
        %1064 = vmatpush1.msra.mxu0 0.0
        %1065 = vmatprep.subr.mxu0 0.0
        %1066 = vmatpush1.msra.mxu0 0.0
        %1067 = vmatprep.subr.mxu0 0.0
        %1068 = vmatpush1.msra.mxu0 0.0
        %1069 = vmatprep.subr.mxu0 0.0
        %1070 = vmatpush1.msra.mxu0 0.0
        %1071 = vmatprep.subr.mxu0 0.0
        %1072 = vmatpush1.msra.mxu0 0.0
        %1073 = vmatprep.subr.mxu0 0.0
        %1074 = vmatpush1.msra.mxu0 0.0
        %1075 = vmatprep.subr.mxu0 0.0
        %1076 = vmatpush1.msra.mxu0 0.0
        %1077 = vmatprep.subr.mxu0 0.0
        %1078 = vmatpush1.msra.mxu0 0.0
        %1079 = vmatprep.subr.mxu0 0.0
        %1080 = vmatpush1.msra.mxu0 0.0
        %1081 = vmatprep.subr.mxu0 0.0
        %1082 = vmatpush1.msra.mxu0 0.0
        %1083 = vmatprep.mubr.f32.mxu0 0.0
        %1084 = vmatmul.mubr.f32.gmra.mrb[0].mxu0 %v1017
        %v1085 = vpop.f32.mrb[0].mxu0
        %v1086 = vadd.f32 0.0, %v1085
        %v1087 = vpop.f32.mrb[0].mxu0
        %1088 = vdwg.mxu0
        %v1090 = vsel %vm421, %v1086, 0
        %1092 = vmatprep.subr.mxu0 0.0
        %1093 = vmatpush1.msra.mxu0 %v419
        %1094 = vmatprep.subr.mxu0 0.0
        %1095 = vmatpush1.msra.mxu0 0.0
        %1096 = vmatprep.subr.mxu0 0.0
        %1097 = vmatpush1.msra.mxu0 0.0
        %1098 = vmatprep.subr.mxu0 0.0
        %1099 = vmatpush1.msra.mxu0 0.0
        %1100 = vmatprep.subr.mxu0 0.0
        %1101 = vmatpush1.msra.mxu0 0.0
        %1102 = vmatprep.subr.mxu0 0.0
        %1103 = vmatpush1.msra.mxu0 0.0
        %1104 = vmatprep.subr.mxu0 0.0
        %1105 = vmatpush1.msra.mxu0 0.0
        %1106 = vmatprep.subr.mxu0 0.0
        %1107 = vmatpush1.msra.mxu0 0.0
        %1108 = vmatprep.subr.mxu0 0.0
        %1109 = vmatpush1.msra.mxu0 0.0
        %1110 = vmatprep.subr.mxu0 0.0
        %1111 = vmatpush1.msra.mxu0 0.0
        %1112 = vmatprep.subr.mxu0 0.0
        %1113 = vmatpush1.msra.mxu0 0.0
        %1114 = vmatprep.subr.mxu0 0.0
        %1115 = vmatpush1.msra.mxu0 0.0
        %1116 = vmatprep.subr.mxu0 0.0
        %1117 = vmatpush1.msra.mxu0 0.0
        %1118 = vmatprep.subr.mxu0 0.0
        %1119 = vmatpush1.msra.mxu0 0.0
        %1120 = vmatprep.subr.mxu0 0.0
        %1121 = vmatpush1.msra.mxu0 0.0
        %1122 = vmatprep.subr.mxu0 0.0
        %1123 = vmatpush1.msra.mxu0 0.0
        %1124 = vmatprep.subr.mxu0 0.0
        %1125 = vmatpush1.msra.mxu0 0.0
        %1126 = vmatprep.subr.mxu0 0.0
        %1127 = vmatpush1.msra.mxu0 0.0
        %1128 = vmatprep.subr.mxu0 0.0
        %1129 = vmatpush1.msra.mxu0 0.0
        %1130 = vmatprep.subr.mxu0 0.0
        %1131 = vmatpush1.msra.mxu0 0.0
        %1132 = vmatprep.subr.mxu0 0.0
        %1133 = vmatpush1.msra.mxu0 0.0
        %1134 = vmatprep.subr.mxu0 0.0
        %1135 = vmatpush1.msra.mxu0 0.0
        %1136 = vmatprep.subr.mxu0 0.0
        %1137 = vmatpush1.msra.mxu0 0.0
        %1138 = vmatprep.subr.mxu0 0.0
        %1139 = vmatpush1.msra.mxu0 0.0
        %1140 = vmatprep.subr.mxu0 0.0
        %1141 = vmatpush1.msra.mxu0 0.0
        %1142 = vmatprep.subr.mxu0 0.0
        %1143 = vmatpush1.msra.mxu0 0.0
        %1144 = vmatprep.subr.mxu0 0.0
        %1145 = vmatpush1.msra.mxu0 0.0
        %1146 = vmatprep.subr.mxu0 0.0
        %1147 = vmatpush1.msra.mxu0 0.0
        %1148 = vmatprep.subr.mxu0 0.0
        %1149 = vmatpush1.msra.mxu0 0.0
        %1150 = vmatprep.subr.mxu0 0.0
        %1151 = vmatpush1.msra.mxu0 0.0
        %1152 = vmatprep.subr.mxu0 0.0
        %1153 = vmatpush1.msra.mxu0 0.0
        %1154 = vmatprep.subr.mxu0 0.0
        %1155 = vmatpush1.msra.mxu0 0.0
        %1156 = vmatprep.mubr.f32.mxu0 0.0
        %1157 = vmatmul.mubr.f32.gmra.mrb[0].mxu0 %v1090
        %v1158 = vpop.f32.mrb[0].mxu0
        %v1159 = vadd.f32 0.0, %v1158
        %v1160 = vpop.f32.mrb[0].mxu0
        %1161 = vdwg.mxu0
        %v1162 = vadd.f32 %v912, %v1159
        %1163 = vrot.lane.b32.xlu0 %v592, 104
        %v1164 = vpop.permute.xlu0 %1163
        %1165 = vrot.lane.b32.xlu0 %v409, 104
        %v1166 = vpop.permute.xlu0 %1165
        %1167 = vrot.lane.b32.xlu0 %v410, 104
        %v1168 = vpop.permute.xlu0 %1167
        %v1169 = vsel %vm421, %v1164, 0
        %v1171 = vsel %vm421, %v1166, 0
        %v1173 = vsel %vm421, %v1168, 0
        %1175 = vmatprep.subr.mxu0 0.0
        %1176 = vmatpush1.xpose.msra.mxu0 %v1171
        %1177 = vmatprep.subr.mxu0 0.0
        %1178 = vmatpush1.xpose.msra.mxu0 %v1173
        %1179 = vmatprep.subr.mxu0 0.0
        %1180 = vmatpush1.xpose.msra.mxu0 0.0
        %1181 = vmatprep.subr.mxu0 0.0
        %1182 = vmatpush1.xpose.msra.mxu0 0.0
        %1183 = vmatprep.subr.mxu0 0.0
        %1184 = vmatpush1.xpose.msra.mxu0 0.0
        %1185 = vmatprep.subr.mxu0 0.0
        %1186 = vmatpush1.xpose.msra.mxu0 0.0
        %1187 = vmatprep.subr.mxu0 0.0
        %1188 = vmatpush1.xpose.msra.mxu0 0.0
        %1189 = vmatprep.subr.mxu0 0.0
        %1190 = vmatpush1.xpose.msra.mxu0 0.0
        %1191 = vmatprep.subr.mxu0 0.0
        %1192 = vmatpush1.xpose.msra.mxu0 0.0
        %1193 = vmatprep.subr.mxu0 0.0
        %1194 = vmatpush1.xpose.msra.mxu0 0.0
        %1195 = vmatprep.subr.mxu0 0.0
        %1196 = vmatpush1.xpose.msra.mxu0 0.0
        %1197 = vmatprep.subr.mxu0 0.0
        %1198 = vmatpush1.xpose.msra.mxu0 0.0
        %1199 = vmatprep.subr.mxu0 0.0
        %1200 = vmatpush1.xpose.msra.mxu0 0.0
        %1201 = vmatprep.subr.mxu0 0.0
        %1202 = vmatpush1.xpose.msra.mxu0 0.0
        %1203 = vmatprep.subr.mxu0 0.0
        %1204 = vmatpush1.xpose.msra.mxu0 0.0
        %1205 = vmatprep.subr.mxu0 0.0
        %1206 = vmatpush1.xpose.msra.mxu0 0.0
        %1207 = vmatprep.subr.mxu0 0.0
        %1208 = vmatpush1.xpose.msra.mxu0 0.0
        %1209 = vmatprep.subr.mxu0 0.0
        %1210 = vmatpush1.xpose.msra.mxu0 0.0
        %1211 = vmatprep.subr.mxu0 0.0
        %1212 = vmatpush1.xpose.msra.mxu0 0.0
        %1213 = vmatprep.subr.mxu0 0.0
        %1214 = vmatpush1.xpose.msra.mxu0 0.0
        %1215 = vmatprep.subr.mxu0 0.0
        %1216 = vmatpush1.xpose.msra.mxu0 0.0
        %1217 = vmatprep.subr.mxu0 0.0
        %1218 = vmatpush1.xpose.msra.mxu0 0.0
        %1219 = vmatprep.subr.mxu0 0.0
        %1220 = vmatpush1.xpose.msra.mxu0 0.0
        %1221 = vmatprep.subr.mxu0 0.0
        %1222 = vmatpush1.xpose.msra.mxu0 0.0
        %1223 = vmatprep.subr.mxu0 0.0
        %1224 = vmatpush1.xpose.msra.mxu0 0.0
        %1225 = vmatprep.subr.mxu0 0.0
        %1226 = vmatpush1.xpose.msra.mxu0 0.0
        %1227 = vmatprep.subr.mxu0 0.0
        %1228 = vmatpush1.xpose.msra.mxu0 0.0
        %1229 = vmatprep.subr.mxu0 0.0
        %1230 = vmatpush1.xpose.msra.mxu0 0.0
        %1231 = vmatprep.subr.mxu0 0.0
        %1232 = vmatpush1.xpose.msra.mxu0 0.0
        %1233 = vmatprep.subr.mxu0 0.0
        %1234 = vmatpush1.xpose.msra.mxu0 0.0
        %1235 = vmatprep.subr.mxu0 0.0
        %1236 = vmatpush1.xpose.msra.mxu0 0.0
        %1237 = vmatprep.subr.mxu0 0.0
        %1238 = vmatpush1.xpose.msra.mxu0 0.0
        %1239 = vmatprep.mubr.f32.mxu0 0.0
        %1240 = vmatmul.mubr.f32.gmra.mrb[0].mxu0 %v1169
        %v1241 = vpop.f32.mrb[0].mxu0
        %v1242 = vadd.f32 0.0, %v1241
        %v1243 = vpop.f32.mrb[0].mxu0
        %1244 = vdwg.mxu0
        %v1245 = vmul.f32 %v1242, 0.35355338
        %v1246 = vsel %vm416, %v1245, -1e+30
        %v1247 = vsel %vm503, %v1246, -inf
        %1248 = vmax.xlane.f32.xlu0 %v1247
        %v1249 = vpop.xlane.xlu0 %1248
        %v1250 = vsub.f32 %v1246, %v1249
        %v1251 = vmul.f32 %v1250, 1.442695
        %v1252 = vpow.pop %v1251
        %v1253 = vsel %vm503, %v1252, 0.0
        %1254 = vadd.xlane.f32.xlu0 %v1253
        %v1255 = vpop.xlane.xlu0 %1254
        %v1256 = vrcp.pop %v1255
        %v1257 = vmul.f32 %v1252, %v1256
        %1258 = vrot.lane.b32.xlu0 %v411, 104
        %v1259 = vpop.permute.xlu0 %1258
        %1260 = vrot.lane.b32.xlu0 %v412, 104
        %v1261 = vpop.permute.xlu0 %1260
        %v1265 = vsel %vm515, %v1257, 0
        %1267 = vmatprep.subr.mxu0 0.0
        %1268 = vmatpush1.msra.mxu0 %v1259
        %1269 = vmatprep.subr.mxu0 0.0
        %1270 = vmatpush1.msra.mxu0 %v1261
        %1271 = vmatprep.subr.mxu0 0.0
        %1272 = vmatpush1.msra.mxu0 0.0
        %1273 = vmatprep.subr.mxu0 0.0
        %1274 = vmatpush1.msra.mxu0 0.0
        %1275 = vmatprep.subr.mxu0 0.0
        %1276 = vmatpush1.msra.mxu0 0.0
        %1277 = vmatprep.subr.mxu0 0.0
        %1278 = vmatpush1.msra.mxu0 0.0
        %1279 = vmatprep.subr.mxu0 0.0
        %1280 = vmatpush1.msra.mxu0 0.0
        %1281 = vmatprep.subr.mxu0 0.0
        %1282 = vmatpush1.msra.mxu0 0.0
        %1283 = vmatprep.subr.mxu0 0.0
        %1284 = vmatpush1.msra.mxu0 0.0
        %1285 = vmatprep.subr.mxu0 0.0
        %1286 = vmatpush1.msra.mxu0 0.0
        %1287 = vmatprep.subr.mxu0 0.0
        %1288 = vmatpush1.msra.mxu0 0.0
        %1289 = vmatprep.subr.mxu0 0.0
        %1290 = vmatpush1.msra.mxu0 0.0
        %1291 = vmatprep.subr.mxu0 0.0
        %1292 = vmatpush1.msra.mxu0 0.0
        %1293 = vmatprep.subr.mxu0 0.0
        %1294 = vmatpush1.msra.mxu0 0.0
        %1295 = vmatprep.subr.mxu0 0.0
        %1296 = vmatpush1.msra.mxu0 0.0
        %1297 = vmatprep.subr.mxu0 0.0
        %1298 = vmatpush1.msra.mxu0 0.0
        %1299 = vmatprep.subr.mxu0 0.0
        %1300 = vmatpush1.msra.mxu0 0.0
        %1301 = vmatprep.subr.mxu0 0.0
        %1302 = vmatpush1.msra.mxu0 0.0
        %1303 = vmatprep.subr.mxu0 0.0
        %1304 = vmatpush1.msra.mxu0 0.0
        %1305 = vmatprep.subr.mxu0 0.0
        %1306 = vmatpush1.msra.mxu0 0.0
        %1307 = vmatprep.subr.mxu0 0.0
        %1308 = vmatpush1.msra.mxu0 0.0
        %1309 = vmatprep.subr.mxu0 0.0
        %1310 = vmatpush1.msra.mxu0 0.0
        %1311 = vmatprep.subr.mxu0 0.0
        %1312 = vmatpush1.msra.mxu0 0.0
        %1313 = vmatprep.subr.mxu0 0.0
        %1314 = vmatpush1.msra.mxu0 0.0
        %1315 = vmatprep.subr.mxu0 0.0
        %1316 = vmatpush1.msra.mxu0 0.0
        %1317 = vmatprep.subr.mxu0 0.0
        %1318 = vmatpush1.msra.mxu0 0.0
        %1319 = vmatprep.subr.mxu0 0.0
        %1320 = vmatpush1.msra.mxu0 0.0
        %1321 = vmatprep.subr.mxu0 0.0
        %1322 = vmatpush1.msra.mxu0 0.0
        %1323 = vmatprep.subr.mxu0 0.0
        %1324 = vmatpush1.msra.mxu0 0.0
        %1325 = vmatprep.subr.mxu0 0.0
        %1326 = vmatpush1.msra.mxu0 0.0
        %1327 = vmatprep.subr.mxu0 0.0
        %1328 = vmatpush1.msra.mxu0 0.0
        %1329 = vmatprep.subr.mxu0 0.0
        %1330 = vmatpush1.msra.mxu0 0.0
        %1331 = vmatprep.mubr.f32.mxu0 0.0
        %1332 = vmatmul.mubr.f32.gmra.mrb[0].mxu0 %v1265
        %v1333 = vpop.f32.mrb[0].mxu0
        %v1334 = vadd.f32 0.0, %v1333
        %v1335 = vpop.f32.mrb[0].mxu0
        %1336 = vdwg.mxu0
        %v1338 = vsel %vm421, %v1334, 0
        %1340 = vmatprep.subr.mxu0 0.0
        %1341 = vmatpush1.msra.mxu0 %v420
        %1342 = vmatprep.subr.mxu0 0.0
        %1343 = vmatpush1.msra.mxu0 0.0
        %1344 = vmatprep.subr.mxu0 0.0
        %1345 = vmatpush1.msra.mxu0 0.0
        %1346 = vmatprep.subr.mxu0 0.0
        %1347 = vmatpush1.msra.mxu0 0.0
        %1348 = vmatprep.subr.mxu0 0.0
        %1349 = vmatpush1.msra.mxu0 0.0
        %1350 = vmatprep.subr.mxu0 0.0
        %1351 = vmatpush1.msra.mxu0 0.0
        %1352 = vmatprep.subr.mxu0 0.0
        %1353 = vmatpush1.msra.mxu0 0.0
        %1354 = vmatprep.subr.mxu0 0.0
        %1355 = vmatpush1.msra.mxu0 0.0
        %1356 = vmatprep.subr.mxu0 0.0
        %1357 = vmatpush1.msra.mxu0 0.0
        %1358 = vmatprep.subr.mxu0 0.0
        %1359 = vmatpush1.msra.mxu0 0.0
        %1360 = vmatprep.subr.mxu0 0.0
        %1361 = vmatpush1.msra.mxu0 0.0
        %1362 = vmatprep.subr.mxu0 0.0
        %1363 = vmatpush1.msra.mxu0 0.0
        %1364 = vmatprep.subr.mxu0 0.0
        %1365 = vmatpush1.msra.mxu0 0.0
        %1366 = vmatprep.subr.mxu0 0.0
        %1367 = vmatpush1.msra.mxu0 0.0
        %1368 = vmatprep.subr.mxu0 0.0
        %1369 = vmatpush1.msra.mxu0 0.0
        %1370 = vmatprep.subr.mxu0 0.0
        %1371 = vmatpush1.msra.mxu0 0.0
        %1372 = vmatprep.subr.mxu0 0.0
        %1373 = vmatpush1.msra.mxu0 0.0
        %1374 = vmatprep.subr.mxu0 0.0
        %1375 = vmatpush1.msra.mxu0 0.0
        %1376 = vmatprep.subr.mxu0 0.0
        %1377 = vmatpush1.msra.mxu0 0.0
        %1378 = vmatprep.subr.mxu0 0.0
        %1379 = vmatpush1.msra.mxu0 0.0
        %1380 = vmatprep.subr.mxu0 0.0
        %1381 = vmatpush1.msra.mxu0 0.0
        %1382 = vmatprep.subr.mxu0 0.0
        %1383 = vmatpush1.msra.mxu0 0.0
        %1384 = vmatprep.subr.mxu0 0.0
        %1385 = vmatpush1.msra.mxu0 0.0
        %1386 = vmatprep.subr.mxu0 0.0
        %1387 = vmatpush1.msra.mxu0 0.0
        %1388 = vmatprep.subr.mxu0 0.0
        %1389 = vmatpush1.msra.mxu0 0.0
        %1390 = vmatprep.subr.mxu0 0.0
        %1391 = vmatpush1.msra.mxu0 0.0
        %1392 = vmatprep.subr.mxu0 0.0
        %1393 = vmatpush1.msra.mxu0 0.0
        %1394 = vmatprep.subr.mxu0 0.0
        %1395 = vmatpush1.msra.mxu0 0.0
        %1396 = vmatprep.subr.mxu0 0.0
        %1397 = vmatpush1.msra.mxu0 0.0
        %1398 = vmatprep.subr.mxu0 0.0
        %1399 = vmatpush1.msra.mxu0 0.0
        %1400 = vmatprep.subr.mxu0 0.0
        %1401 = vmatpush1.msra.mxu0 0.0
        %1402 = vmatprep.subr.mxu0 0.0
        %1403 = vmatpush1.msra.mxu0 0.0
        %1404 = vmatprep.mubr.f32.mxu0 0.0
        %1405 = vmatmul.mubr.f32.gmra.mrb[0].mxu0 %v1338
        %v1406 = vpop.f32.mrb[0].mxu0
        %v1407 = vadd.f32 0.0, %v1406
        %v1408 = vpop.f32.mrb[0].mxu0
        %1409 = vdwg.mxu0
        %v1410 = vadd.f32 %v1162, %v1407
        %vm1411 = vcmask 261120
        %v1413 = vsel %vm1411, %v1410, 0
        %v1416 = vsel %vm1411, %v413, 0
        %v1419 = vsel %vm1411, %v414, 0
        %1421 = vmatprep.subr.mxu0 0.0
        %1422 = vmatpush1.xpose.msra.mxu0 %v1416
        %1423 = vmatprep.subr.mxu0 0.0
        %1424 = vmatpush1.xpose.msra.mxu0 %v1419
        %1425 = vmatprep.subr.mxu0 0.0
        %1426 = vmatpush1.xpose.msra.mxu0 0.0
        %1427 = vmatprep.subr.mxu0 0.0
        %1428 = vmatpush1.xpose.msra.mxu0 0.0
        %1429 = vmatprep.subr.mxu0 0.0
        %1430 = vmatpush1.xpose.msra.mxu0 0.0
        %1431 = vmatprep.subr.mxu0 0.0
        %1432 = vmatpush1.xpose.msra.mxu0 0.0
        %1433 = vmatprep.subr.mxu0 0.0
        %1434 = vmatpush1.xpose.msra.mxu0 0.0
        %1435 = vmatprep.subr.mxu0 0.0
        %1436 = vmatpush1.xpose.msra.mxu0 0.0
        %1437 = vmatprep.subr.mxu0 0.0
        %1438 = vmatpush1.xpose.msra.mxu0 0.0
        %1439 = vmatprep.subr.mxu0 0.0
        %1440 = vmatpush1.xpose.msra.mxu0 0.0
        %1441 = vmatprep.subr.mxu0 0.0
        %1442 = vmatpush1.xpose.msra.mxu0 0.0
        %1443 = vmatprep.subr.mxu0 0.0
        %1444 = vmatpush1.xpose.msra.mxu0 0.0
        %1445 = vmatprep.subr.mxu0 0.0
        %1446 = vmatpush1.xpose.msra.mxu0 0.0
        %1447 = vmatprep.subr.mxu0 0.0
        %1448 = vmatpush1.xpose.msra.mxu0 0.0
        %1449 = vmatprep.subr.mxu0 0.0
        %1450 = vmatpush1.xpose.msra.mxu0 0.0
        %1451 = vmatprep.subr.mxu0 0.0
        %1452 = vmatpush1.xpose.msra.mxu0 0.0
        %1453 = vmatprep.subr.mxu0 0.0
        %1454 = vmatpush1.xpose.msra.mxu0 0.0
        %1455 = vmatprep.subr.mxu0 0.0
        %1456 = vmatpush1.xpose.msra.mxu0 0.0
        %1457 = vmatprep.subr.mxu0 0.0
        %1458 = vmatpush1.xpose.msra.mxu0 0.0
        %1459 = vmatprep.subr.mxu0 0.0
        %1460 = vmatpush1.xpose.msra.mxu0 0.0
        %1461 = vmatprep.subr.mxu0 0.0
        %1462 = vmatpush1.xpose.msra.mxu0 0.0
        %1463 = vmatprep.subr.mxu0 0.0
        %1464 = vmatpush1.xpose.msra.mxu0 0.0
        %1465 = vmatprep.subr.mxu0 0.0
        %1466 = vmatpush1.xpose.msra.mxu0 0.0
        %1467 = vmatprep.subr.mxu0 0.0
        %1468 = vmatpush1.xpose.msra.mxu0 0.0
        %1469 = vmatprep.subr.mxu0 0.0
        %1470 = vmatpush1.xpose.msra.mxu0 0.0
        %1471 = vmatprep.subr.mxu0 0.0
        %1472 = vmatpush1.xpose.msra.mxu0 0.0
        %1473 = vmatprep.subr.mxu0 0.0
        %1474 = vmatpush1.xpose.msra.mxu0 0.0
        %1475 = vmatprep.subr.mxu0 0.0
        %1476 = vmatpush1.xpose.msra.mxu0 0.0
        %1477 = vmatprep.subr.mxu0 0.0
        %1478 = vmatpush1.xpose.msra.mxu0 0.0
        %1479 = vmatprep.subr.mxu0 0.0
        %1480 = vmatpush1.xpose.msra.mxu0 0.0
        %1481 = vmatprep.subr.mxu0 0.0
        %1482 = vmatpush1.xpose.msra.mxu0 0.0
        %1483 = vmatprep.subr.mxu0 0.0
        %1484 = vmatpush1.xpose.msra.mxu0 0.0
        %1485 = vmatprep.mubr.f32.mxu0 0.0
        %1486 = vmatmul.mubr.f32.gmra.mrb[0].mxu0 %v1413
        %v1487 = vpop.f32.mrb[0].mxu0
        %v1488 = vadd.f32 0.0, %v1487
        %v1489 = vpop.f32.mrb[0].mxu0
        %1490 = vdwg.mxu0
        %v1491 = vmul.f32 %v1488, 0.17677669
        %1492 = vst.msk [vmem:[%s404] sm:$0x1] %vm503, %v1491
        %s1493 = sand.u32 %s188, 1
        %s1494 = scalar_lea.sflag [#allocation4], %s1493
        %s1495 = sand.u32 %s188, 1
        %s1496 = scalar_lea.vmem [#allocation11], %s1495
        // Predicated region
        $region65: #{tpu_custom_call.1} parent=43 // pred_check
          %p1497 = pneg %p198
        $region66: #{tpu_custom_call.1} parent=43 // pred_check_branch
          %1499 = sbr.rel (%p1497) target = $region68
        $region67: #{tpu_custom_call.1} parent=43 // pred_region
          %s1501 = ssub.s32 16, 16
          %1502 = vsyncadd %s1494, %s1501
          %s1503 = smul.addr %s29, 16
          %s1504 = scalar_lea.hbm %s6, %s1503
          %s1506 = sshll.u32 %s1496, 4
          %s1507 = int_to_ptr.vmem [resolvable:$true] %s1506
          %1509 = dma.vmem_to_hbm [thread:$0]  %s1507, 16, %s1504, %s1494
        $region68: #{tpu_custom_call.1} parent=43 // pred_fallthru
          _
      $region44: #{tpu_custom_call.1} parent=5 // pred_fallthru
        _
      %p1510 = scmp.le.s32.totalorder 2, %s24
      // Predicated region
      $region69: #{tpu_custom_call.1} parent=5 // pred_check
        %p1511 = pneg %p1510
      $region70: #{tpu_custom_call.1} parent=5 // pred_check_branch
        %1513 = sbr.rel (%p1511) target = $region72
      $region71: #{tpu_custom_call.1} parent=5 // pred_region
        %s1514 = ssub.s32 %s24, 2
        // Predicated region
        $region73: #{tpu_custom_call.1} parent=71 // pred_check
          %p1515 = pneg %p204
        $region74: #{tpu_custom_call.1} parent=71 // pred_check_branch
          %1517 = sbr.rel (%p1515) target = $region76
        $region75: #{tpu_custom_call.1} parent=71 // pred_region
          %s1518 = sand.u32 %s189, 1
          %s1519 = scalar_lea.sflag [#allocation4], %s1518
          %s1520 = sand.u32 %s189, 1
          %s1521 = scalar_lea.vmem [#allocation11], %s1520
          %1522 = dma.done %s1519, 16
        $region76: #{tpu_custom_call.1} parent=71 // pred_fallthru
          _
      $region72: #{tpu_custom_call.1} parent=5 // pred_fallthru
        _
    $region6: #{tpu_custom_call.1} parent=1 // loop_footer
      %s28 = sadd.s32 1, %s24
    $region7: #{tpu_custom_call.1} parent=1 // loop_footer_branch
      %23 = sbr.rel target = $region3
    $region8: #{tpu_custom_call.1} parent=1 // loop_exit
      _
    %1523 = vsyncpa [#allocation3], 1
    %s1524 = scalar_lea.sflag [#allocation3], 1
    %1525 = vsyncpa %s1524, 1
    %1526 = vsyncpa [#allocation6], 1
    %s1527 = scalar_lea.sflag [#allocation6], 1
    %1528 = vsyncpa %s1527, 1
    %1529 = vsyncpa [#allocation9], 1
    %s1530 = scalar_lea.sflag [#allocation9], 1
    %1531 = vsyncpa %s1530, 1
    %1532 = vsyncpa [#allocation4], 1
    %s1533 = scalar_lea.sflag [#allocation4], 1
    %1534 = vsyncpa %s1533, 1

</llo_original>
